<compile_context>
chip_gen: v6e
topology: v6e:2x2x1
jax: 0.10.0
libtpu: 0.0.40
codegen_flags: <defaults>
</compile_context>

<pallas_src>
import jax
import jax.numpy as jnp
from jax.experimental import pallas as pl
from jax.experimental.pallas import tpu as pltpu

EPS_BN = 1e-5      # nn.BatchNorm1d default eps
EPS_NORM = 1e-12   # F.normalize default eps

# ---------------- shapes (small but lane-dense) ----------------
B = 4        # batch (per view)
N = 16       # points per cloud
C = 3        # xyz
CPAD = 8     # encoder contraction dim zero-padded to one sublane tile
E = 128      # encoder output_dim                (lane-dense)
H = 256      # projection_MLP hidden_dim         (scaled down from 4096)
P = 128      # projection / prediction out_dim   (scaled down from 256)
HP = 256     # prediction_MLP hidden_dim         (scaled down from 4096)

# Packing requires these (toy-shape convenience, noted for the real model):
assert P == E and HP == H and H == 2 * E


# ---------------- fused BYOL forward kernel ----------------
def byol_kernel(x_ref, wenc_ref, wup_ref, wdn_hbm, vec_ref, loss_ref,
                wdn_buf, dma_sem):
    # x_ref:    (N, 2B, CPAD) f32   point-major stacked [x1; x2], coords zero-padded
    # wenc_ref: (CPAD, 2*E)   f32   [We_online | We_target] along lanes
    # wup_ref:  (3, E, H)     bf16  [W1_online, Wpred1, W1_target]
    # wdn_hbm:  (3, H, P)     bf16  raw HBM ref (manually prefetched into wdn_buf)
    # vec_ref:  (16, H)       f32   biases / gammas / betas (see pack_params layout)
    # loss_ref: (1, 1)        f32   SMEM scalar output
    # wdn_buf:  (3, H, P)     bf16  VMEM scratch   |   dma_sem: (3,) DMA semaphores

    def wdn_copy(k):
        return pltpu.make_async_copy(wdn_hbm.at[k], wdn_buf.at[k], dma_sem.at[k])

    # Kick off the three down-weight DMAs now; each is waited on right before its
    # dot, so the transfers overlap the encoder loop, the up matmuls and the BNs.
    for k in range(3):
        wdn_copy(k).start()

    vecs = vec_ref[...]                 # (16, H) f32, 4 vregs

    # view-1 / view-2 row mask, hoisted once (rows 0..B-1 are view 1)
    rows = jax.lax.broadcasted_iota(jnp.int32, (2 * B, 1), 0)
    m1 = (rows < B).astype(jnp.float32)           # (2B, 1)
    m2 = 1.0 - m1
    inv_b = 1.0 / B

    # ---- shared encoder (online | target packed along lanes) ----
    # K=3 contraction as 3 broadcast FMAs on the VPU, running max-pool over points.
    we = wenc_ref[...]                  # only rows 0..2 are nonzero
    w0, w1, w2 = we[0:1, :], we[1:2, :], we[2:3, :]
    be = vecs[0:1, :]                   # [be_o | be_t]

    def enc_step(n, fmax):
        xc = x_ref[n]                   # (2B, CPAD): point n of every cloud
        h = xc[:, 0:1] * w0 + xc[:, 1:2] * w1 + xc[:, 2:3] * w2
        return jnp.maximum(fmax, jnp.maximum(h + be, 0.0))

    # ReLU outputs are >= 0, so a zero init gives the exact max-pool.
    f = jax.lax.fori_loop(0, N, enc_step,
                          jnp.zeros((2 * B, 2 * E), jnp.float32), unroll=True)
    f_o = f[:, 0:E]                     # online encoder features  (2B, E)
    f_t = f[:, E:2 * E]                 # target encoder features  (2B, E)

    def bn_per_view(y, gamma, beta):
        # Training-mode BatchNorm1d with statistics per 4-row view (rows 0:B, B:2B).
        # Second view's sums derived by subtraction; everything stays full-tile.
        s_all = jnp.sum(y, axis=0, keepdims=True)
        s1 = jnp.sum(y * m1, axis=0, keepdims=True)
        mu = m1 * (s1 * inv_b) + m2 * ((s_all - s1) * inv_b)
        d = y - mu
        dd = d * d
        q_all = jnp.sum(dd, axis=0, keepdims=True)
        q1 = jnp.sum(dd * m1, axis=0, keepdims=True)
        var = m1 * (q1 * inv_b) + m2 * ((q_all - q1) * inv_b)   # biased variance
        return gamma * d * jax.lax.rsqrt(var + EPS_BN) + beta

    def mlp2(z, k, b1, g, t, b2):
        # Linear -> BN -> ReLU -> Linear.  Weight slices are loaded lazily right
        # before each dot (live weight tiles never overlap); only dot operands are
        # bf16, all elementwise / BN math stays f32 (v5e-safe).
        y = jnp.dot(z.astype(jnp.bfloat16), wup_ref[k],
                    preferred_element_type=jnp.float32) + b1
        y = jnp.maximum(bn_per_view(y, g, t), 0.0)
        wdn_copy(k).wait()              # down-weight slice k has landed in VMEM
        return jnp.dot(y.astype(jnp.bfloat16), wdn_buf[k],
                       preferred_element_type=jnp.float32) + b2

    # online projector, online predictor, target projector
    # TODO(synk): target branch is torch.no_grad in the module; add stop_gradient
    # if this forward ever backs a custom_vjp training path.
    z_o = mlp2(f_o, 0, vecs[1:2, :], vecs[2:3, :], vecs[3:4, :], vecs[4:5, 0:P])
    p_o = mlp2(z_o, 1, vecs[5:6, :], vecs[6:7, :], vecs[7:8, :], vecs[8:9, 0:P])
    z_t = mlp2(f_t, 2, vecs[9:10, :], vecs[10:11, :], vecs[11:12, :], vecs[12:13, 0:P])

    # ---- L = D(p1_o, z2_t)/2 + D(p2_o, z1_t)/2 ----
    def l2_normalize(v):
        ss = jnp.sum(v * v, axis=-1, keepdims=True)
        # v / max(||v||, eps) == v * rsqrt(max(ss, eps^2)); rsqrt runs on the EUP.
        return v * jax.lax.rsqrt(jnp.maximum(ss, EPS_NORM * EPS_NORM))

    p_hat = l2_normalize(p_o)           # rows 0:B = p1_o, rows B:2B = p2_o
    z_hat = l2_normalize(z_t)           # rows 0:B = z1_t, rows B:2B = z2_t
    # Full-tile sublane roll pairs p1<->z2_t and p2<->z1_t in one reduce.
    z_swap = pltpu.roll(z_hat, B, 0)
    loss_ref[0, 0] = -jnp.sum(p_hat * z_swap) * (0.5 * inv_b)


# ---------------- wrapper ----------------
@jax.jit
def point_byol_forward(x1, x2, wenc, wup, wdn, vecs):
    b, n, c = x1.shape
    # One stacked, point-major slab: (N, 2B, CPAD), coords zero-padded.
    x = jnp.concatenate([x1, x2], axis=0)                 # (2B, N, C)
    x = jnp.transpose(x, (1, 0, 2))                       # (N, 2B, C)
    x = jnp.pad(x, ((0, 0), (0, 0), (0, CPAD - c)))       # (N, 2B, CPAD)
    vmem = pl.BlockSpec(memory_space=pltpu.MemorySpace.VMEM)
    loss = pl.pallas_call(
        byol_kernel,
        out_shape=jax.ShapeDtypeStruct((1, 1), jnp.float32),
        in_specs=[vmem, vmem, vmem,
                  pl.BlockSpec(memory_space=pl.ANY),      # wdn stays in HBM; manual DMA
                  vmem],
        out_specs=pl.BlockSpec(memory_space=pltpu.MemorySpace.SMEM),
        scratch_shapes=[pltpu.VMEM((3, H, P), jnp.bfloat16),
                        pltpu.SemaphoreType.DMA((3,))],
    )(x, wenc, wup, wdn, vecs)
    return loss[0, 0]


# ---------------- deterministic parameter init (PyTorch-style) ----------------
def init_linear(key, in_dim, out_dim):
    kw, kb = jax.random.split(key)
    bound = 1.0 / (in_dim ** 0.5)
    W = jax.random.uniform(kw, (in_dim, out_dim), jnp.float32, -bound, bound)
    b = jax.random.uniform(kb, (1, out_dim), jnp.float32, -bound, bound)
    return W, b


def make_params(key):
    keys = jax.random.split(key, 8)
    we, be = init_linear(keys[0], C, E)       # synthetic encoder
    w1, b1 = init_linear(keys[1], E, H)       # projector layer1
    w2, b2 = init_linear(keys[2], H, P)       # projector layer2
    wp1, bp1 = init_linear(keys[3], P, HP)    # predictor layer1
    wp2, bp2 = init_linear(keys[4], HP, P)    # predictor layer2
    ones_h, zeros_h = jnp.ones((1, H), jnp.float32), jnp.zeros((1, H), jnp.float32)
    ones_hp, zeros_hp = jnp.ones((1, HP), jnp.float32), jnp.zeros((1, HP), jnp.float32)
    return dict(
        # online encoder + projector
        we_o=we, be_o=be,
        w1_o=w1, b1_o=b1, g1_o=ones_h, t1_o=zeros_h, w2_o=w2, b2_o=b2,
        # online predictor
        wp1=wp1, bp1=bp1, gp=ones_hp, tp=zeros_hp, wp2=wp2, bp2=bp2,
        # target = deepcopy of online encoder + projector
        we_t=jnp.array(we), be_t=jnp.array(be),
        w1_t=jnp.array(w1), b1_t=jnp.array(b1), g1_t=jnp.array(ones_h),
        t1_t=jnp.array(zeros_h), w2_t=jnp.array(w2), b2_t=jnp.array(b2),
    )


def pack_params(p):
    """Pack 22 parameter arrays into 4 contiguous, lane-dense slabs.

    Matmul weights (wup/wdn) go to bf16; the tiny encoder weights and all
    bias/gamma/beta rows stay f32 (used by VPU/EUP elementwise math).
    """
    # encoder weights side-by-side along output lanes, K padded C -> CPAD (f32, VPU)
    wenc = jnp.zeros((CPAD, 2 * E), jnp.float32)
    wenc = wenc.at[0:C, 0:E].set(p["we_o"])
    wenc = wenc.at[0:C, E:2 * E].set(p["we_t"])
    # "up" (E,H) and "down" (H,P) weights, stacked along a leading axis, bf16
    wup = jnp.stack([p["w1_o"], p["wp1"], p["w1_t"]], axis=0).astype(jnp.bfloat16)
    wdn = jnp.stack([p["w2_o"], p["wp2"], p["w2_t"]], axis=0).astype(jnp.bfloat16)

    def pad_row(v):  # (1, d<=H) -> (1, H)
        r = jnp.zeros((1, H), jnp.float32)
        return r.at[:, : v.shape[1]].set(v)

    rows = [
        jnp.concatenate([p["be_o"], p["be_t"]], axis=1),        # 0: [be_o | be_t]
        p["b1_o"], p["g1_o"], p["t1_o"], pad_row(p["b2_o"]),    # 1-4: online projector
        p["bp1"], p["gp"], p["tp"], pad_row(p["bp2"]),          # 5-8: online predictor
        p["b1_t"], p["g1_t"], p["t1_t"], pad_row(p["b2_t"]),    # 9-12: target projector
    ]
    rows += [jnp.zeros((1, H), jnp.float32)] * (16 - len(rows))
    vecs = jnp.concatenate(rows, axis=0)                        # (16, H) f32
    return wenc, wup, wdn, vecs


# ---------------- pure-JAX reference (sanity check) ----------------
def reference_forward(x1, x2, p):
    def enc(x, W, b):
        h = jnp.maximum(jnp.einsum("bnc,ce->bne", x, W) + b, 0.0)
        return jnp.max(h, axis=1)

    def mlp2(z, W1, b1, g, t, W2, b2):
        y = z @ W1 + b1
        mu = jnp.mean(y, 0, keepdims=True)
        var = jnp.mean((y - mu) ** 2, 0, keepdims=True)
        y = jnp.maximum(g * (y - mu) * jax.lax.rsqrt(var + EPS_BN) + t, 0.0)
        return y @ W2 + b2

    def D(pp, zz):
        pp = pp / jnp.maximum(jnp.linalg.norm(pp, axis=-1, keepdims=True), EPS_NORM)
        zz = zz / jnp.maximum(jnp.linalg.norm(zz, axis=-1, keepdims=True), EPS_NORM)
        return -jnp.mean(jnp.sum(pp * zz, axis=-1))

    def online(x):
        f = enc(x, p["we_o"], p["be_o"])
        return mlp2(f, p["w1_o"], p["b1_o"], p["g1_o"], p["t1_o"], p["w2_o"], p["b2_o"])

    def target(x):
        f = enc(x, p["we_t"], p["be_t"])
        return mlp2(f, p["w1_t"], p["b1_t"], p["g1_t"], p["t1_t"], p["w2_t"], p["b2_t"])

    def predict(z):
        return mlp2(z, p["wp1"], p["bp1"], p["gp"], p["tp"], p["wp2"], p["bp2"])

    z1_o, z2_o = online(x1), online(x2)
    p1_o, p2_o = predict(z1_o), predict(z2_o)
    z1_t, z2_t = target(x1), target(x2)
    return 0.5 * D(p1_o, z2_t) + 0.5 * D(p2_o, z1_t)


if __name__ == "__main__":
    key = jax.random.PRNGKey(0)
    kx1, kx2, kp = jax.random.split(key, 3)
    x1 = jax.random.normal(kx1, (B, N, C), jnp.float32)
    x2 = jax.random.normal(kx2, (B, N, C), jnp.float32)
    params = make_params(kp)
    wenc, wup, wdn, vecs = pack_params(params)

    loss = point_byol_forward(x1, x2, wenc, wup, wdn, vecs)
    jax.block_until_ready(loss)

    with jax.default_matmul_precision("highest"):
        ref = reference_forward(x1, x2, params)

    assert jnp.isfinite(loss), "loss is not finite"
    # bf16 weight storage + bf16 MXU operands vs f32 "highest" reference.
    assert abs(float(loss) - float(ref)) < 1e-2, (float(loss), float(ref))

    print("KERNEL_OK")
</pallas_src>

<mosaic_0001>
module attributes {stable_mosaic.version = 11 : i64} {
  func.func @byol_kernel(%arg0: memref<16x8x8xf32, #tpu.memory_space<vmem>>, %arg1: memref<8x256xf32, #tpu.memory_space<vmem>>, %arg2: memref<3x128x256xbf16, #tpu.memory_space<vmem>>, %arg3: memref<3x256x128xbf16, #tpu.memory_space<any>>, %arg4: memref<16x256xf32, #tpu.memory_space<vmem>>, %arg5: memref<1x1xf32, #tpu.memory_space<smem>>, %arg6: memref<3x256x128xbf16, #tpu.memory_space<vmem>>, %arg7: memref<3x!tpu.dma_semaphore, #tpu.memory_space<semaphore_mem>>) attributes {dimension_semantics = [], scalar_prefetch = 0 : i64, scratch_operands = 2 : i64, tpu.core_type = #tpu.core_type<tc>} {
    %c0_i32 = arith.constant 0 : i32
    %c0_i32_0 = arith.constant 0 : i32
    %c0_i32_1 = arith.constant 0 : i32
    %c0_i32_2 = arith.constant 0 : i32
    %c0_i32_3 = arith.constant 0 : i32
    %0 = tpu.memref_slice %arg3[%c0_i32, %c0_i32_2, %c0_i32_3] : memref<3x256x128xbf16, #tpu.memory_space<any>> -> memref<1x256x128xbf16, #tpu.memory_space<any>>
    %1 = tpu.memref_squeeze %0 : memref<1x256x128xbf16, #tpu.memory_space<any>> -> memref<256x128xbf16, #tpu.memory_space<any>>
    %c0_i32_4 = arith.constant 0 : i32
    %c0_i32_5 = arith.constant 0 : i32
    %2 = tpu.memref_slice %arg6[%c0_i32_0, %c0_i32_4, %c0_i32_5] : memref<3x256x128xbf16, #tpu.memory_space<vmem>> -> memref<1x256x128xbf16, #tpu.memory_space<vmem>>
    %3 = tpu.memref_squeeze %2 : memref<1x256x128xbf16, #tpu.memory_space<vmem>> -> memref<256x128xbf16, #tpu.memory_space<vmem>>
    %4 = tpu.memref_slice %arg7[%c0_i32_1] : memref<3x!tpu.dma_semaphore, #tpu.memory_space<semaphore_mem>> -> memref<1x!tpu.dma_semaphore, #tpu.memory_space<semaphore_mem>>
    %5 = tpu.memref_squeeze %4 : memref<1x!tpu.dma_semaphore, #tpu.memory_space<semaphore_mem>> -> memref<!tpu.dma_semaphore, #tpu.memory_space<semaphore_mem>>
    tpu.enqueue_dma source(%1 : memref<256x128xbf16, #tpu.memory_space<any>>) target(%3 : memref<256x128xbf16, #tpu.memory_space<vmem>>) target_semaphore(%5 : memref<!tpu.dma_semaphore, #tpu.memory_space<semaphore_mem>>)
    %c1_i32 = arith.constant 1 : i32
    %c1_i32_6 = arith.constant 1 : i32
    %c1_i32_7 = arith.constant 1 : i32
    %c0_i32_8 = arith.constant 0 : i32
    %c0_i32_9 = arith.constant 0 : i32
    %6 = tpu.memref_slice %arg3[%c1_i32, %c0_i32_8, %c0_i32_9] : memref<3x256x128xbf16, #tpu.memory_space<any>> -> memref<1x256x128xbf16, #tpu.memory_space<any>>
    %7 = tpu.memref_squeeze %6 : memref<1x256x128xbf16, #tpu.memory_space<any>> -> memref<256x128xbf16, #tpu.memory_space<any>>
    %c0_i32_10 = arith.constant 0 : i32
    %c0_i32_11 = arith.constant 0 : i32
    %8 = tpu.memref_slice %arg6[%c1_i32_6, %c0_i32_10, %c0_i32_11] : memref<3x256x128xbf16, #tpu.memory_space<vmem>> -> memref<1x256x128xbf16, #tpu.memory_space<vmem>>
    %9 = tpu.memref_squeeze %8 : memref<1x256x128xbf16, #tpu.memory_space<vmem>> -> memref<256x128xbf16, #tpu.memory_space<vmem>>
    %10 = tpu.memref_slice %arg7[%c1_i32_7] : memref<3x!tpu.dma_semaphore, #tpu.memory_space<semaphore_mem>> -> memref<1x!tpu.dma_semaphore, #tpu.memory_space<semaphore_mem>>
    %11 = tpu.memref_squeeze %10 : memref<1x!tpu.dma_semaphore, #tpu.memory_space<semaphore_mem>> -> memref<!tpu.dma_semaphore, #tpu.memory_space<semaphore_mem>>
    tpu.enqueue_dma source(%7 : memref<256x128xbf16, #tpu.memory_space<any>>) target(%9 : memref<256x128xbf16, #tpu.memory_space<vmem>>) target_semaphore(%11 : memref<!tpu.dma_semaphore, #tpu.memory_space<semaphore_mem>>)
    %c2_i32 = arith.constant 2 : i32
    %c2_i32_12 = arith.constant 2 : i32
    %c2_i32_13 = arith.constant 2 : i32
    %c0_i32_14 = arith.constant 0 : i32
    %c0_i32_15 = arith.constant 0 : i32
    %12 = tpu.memref_slice %arg3[%c2_i32, %c0_i32_14, %c0_i32_15] : memref<3x256x128xbf16, #tpu.memory_space<any>> -> memref<1x256x128xbf16, #tpu.memory_space<any>>
    %13 = tpu.memref_squeeze %12 : memref<1x256x128xbf16, #tpu.memory_space<any>> -> memref<256x128xbf16, #tpu.memory_space<any>>
    %c0_i32_16 = arith.constant 0 : i32
    %c0_i32_17 = arith.constant 0 : i32
    %14 = tpu.memref_slice %arg6[%c2_i32_12, %c0_i32_16, %c0_i32_17] : memref<3x256x128xbf16, #tpu.memory_space<vmem>> -> memref<1x256x128xbf16, #tpu.memory_space<vmem>>
    %15 = tpu.memref_squeeze %14 : memref<1x256x128xbf16, #tpu.memory_space<vmem>> -> memref<256x128xbf16, #tpu.memory_space<vmem>>
    %16 = tpu.memref_slice %arg7[%c2_i32_13] : memref<3x!tpu.dma_semaphore, #tpu.memory_space<semaphore_mem>> -> memref<1x!tpu.dma_semaphore, #tpu.memory_space<semaphore_mem>>
    %17 = tpu.memref_squeeze %16 : memref<1x!tpu.dma_semaphore, #tpu.memory_space<semaphore_mem>> -> memref<!tpu.dma_semaphore, #tpu.memory_space<semaphore_mem>>
    tpu.enqueue_dma source(%13 : memref<256x128xbf16, #tpu.memory_space<any>>) target(%15 : memref<256x128xbf16, #tpu.memory_space<vmem>>) target_semaphore(%17 : memref<!tpu.dma_semaphore, #tpu.memory_space<semaphore_mem>>)
    %c0 = arith.constant 0 : index
    %c0_18 = arith.constant 0 : index
    %18 = vector.load %arg4[%c0, %c0_18] : memref<16x256xf32, #tpu.memory_space<vmem>>, vector<16x256xf32>
    %19 = tpu.iota {dimensions = array<i32: 0>} : vector<8x1xi32>
    %c4_i32 = arith.constant 4 : i32
    %20 = vector.broadcast %c4_i32 : i32 to vector<8x1xi32>
    %21 = arith.cmpi slt, %19, %20 : vector<8x1xi32>
    %22 = arith.extui %21 : vector<8x1xi1> to vector<8x1xi32>
    %23 = arith.sitofp %22 : vector<8x1xi32> to vector<8x1xf32>
    %cst = arith.constant 1.000000e+00 : f32
    %24 = vector.broadcast %cst : f32 to vector<8x1xf32>
    %25 = arith.subf %24, %23 : vector<8x1xf32>
    %c0_19 = arith.constant 0 : index
    %c0_20 = arith.constant 0 : index
    %26 = vector.load %arg1[%c0_19, %c0_20] : memref<8x256xf32, #tpu.memory_space<vmem>>, vector<8x256xf32>
    %27 = vector.extract_strided_slice %26 {offsets = [0, 0], sizes = [1, 256], strides = [1, 1]} : vector<8x256xf32> to vector<1x256xf32>
    %28 = vector.extract_strided_slice %26 {offsets = [1, 0], sizes = [1, 256], strides = [1, 1]} : vector<8x256xf32> to vector<1x256xf32>
    %29 = vector.extract_strided_slice %26 {offsets = [2, 0], sizes = [1, 256], strides = [1, 1]} : vector<8x256xf32> to vector<1x256xf32>
    %30 = vector.extract_strided_slice %18 {offsets = [0, 0], sizes = [1, 256], strides = [1, 1]} : vector<16x256xf32> to vector<1x256xf32>
    %cst_21 = arith.constant 0.000000e+00 : f32
    %31 = vector.broadcast %cst_21 : f32 to vector<8x256xf32>
    %c0_i32_22 = arith.constant 0 : i32
    %32 = arith.index_cast %c0_i32_22 : i32 to index
    %c0_23 = arith.constant 0 : index
    %c0_24 = arith.constant 0 : index
    %33 = vector.load %arg0[%32, %c0_23, %c0_24] : memref<16x8x8xf32, #tpu.memory_space<vmem>>, vector<1x8x8xf32>
    %34 = vector.shape_cast %33 : vector<1x8x8xf32> to vector<8x8xf32>
    %35 = vector.extract_strided_slice %34 {offsets = [0, 0], sizes = [8, 1], strides = [1, 1]} : vector<8x8xf32> to vector<8x1xf32>
    %36 = vector.broadcast %35 : vector<8x1xf32> to vector<8x256xf32>
    %37 = vector.broadcast %27 : vector<1x256xf32> to vector<8x256xf32>
    %38 = arith.mulf %36, %37 : vector<8x256xf32>
    %39 = vector.extract_strided_slice %34 {offsets = [0, 1], sizes = [8, 1], strides = [1, 1]} : vector<8x8xf32> to vector<8x1xf32>
    %40 = vector.broadcast %39 : vector<8x1xf32> to vector<8x256xf32>
    %41 = vector.broadcast %28 : vector<1x256xf32> to vector<8x256xf32>
    %42 = arith.mulf %40, %41 : vector<8x256xf32>
    %43 = arith.addf %38, %42 : vector<8x256xf32>
    %44 = vector.extract_strided_slice %34 {offsets = [0, 2], sizes = [8, 1], strides = [1, 1]} : vector<8x8xf32> to vector<8x1xf32>
    %45 = vector.broadcast %44 : vector<8x1xf32> to vector<8x256xf32>
    %46 = vector.broadcast %29 : vector<1x256xf32> to vector<8x256xf32>
    %47 = arith.mulf %45, %46 : vector<8x256xf32>
    %48 = arith.addf %43, %47 : vector<8x256xf32>
    %49 = vector.broadcast %30 : vector<1x256xf32> to vector<8x256xf32>
    %50 = arith.addf %48, %49 : vector<8x256xf32>
    %cst_25 = arith.constant 0.000000e+00 : f32
    %51 = vector.broadcast %cst_25 : f32 to vector<8x256xf32>
    %52 = arith.maximumf %50, %51 : vector<8x256xf32>
    %53 = arith.maximumf %31, %52 : vector<8x256xf32>
    %c1_i32_26 = arith.constant 1 : i32
    %54 = arith.index_cast %c1_i32_26 : i32 to index
    %c0_27 = arith.constant 0 : index
    %c0_28 = arith.constant 0 : index
    %55 = vector.load %arg0[%54, %c0_27, %c0_28] : memref<16x8x8xf32, #tpu.memory_space<vmem>>, vector<1x8x8xf32>
    %56 = vector.shape_cast %55 : vector<1x8x8xf32> to vector<8x8xf32>
    %57 = vector.extract_strided_slice %56 {offsets = [0, 0], sizes = [8, 1], strides = [1, 1]} : vector<8x8xf32> to vector<8x1xf32>
    %58 = vector.broadcast %57 : vector<8x1xf32> to vector<8x256xf32>
    %59 = vector.broadcast %27 : vector<1x256xf32> to vector<8x256xf32>
    %60 = arith.mulf %58, %59 : vector<8x256xf32>
    %61 = vector.extract_strided_slice %56 {offsets = [0, 1], sizes = [8, 1], strides = [1, 1]} : vector<8x8xf32> to vector<8x1xf32>
    %62 = vector.broadcast %61 : vector<8x1xf32> to vector<8x256xf32>
    %63 = vector.broadcast %28 : vector<1x256xf32> to vector<8x256xf32>
    %64 = arith.mulf %62, %63 : vector<8x256xf32>
    %65 = arith.addf %60, %64 : vector<8x256xf32>
    %66 = vector.extract_strided_slice %56 {offsets = [0, 2], sizes = [8, 1], strides = [1, 1]} : vector<8x8xf32> to vector<8x1xf32>
    %67 = vector.broadcast %66 : vector<8x1xf32> to vector<8x256xf32>
    %68 = vector.broadcast %29 : vector<1x256xf32> to vector<8x256xf32>
    %69 = arith.mulf %67, %68 : vector<8x256xf32>
    %70 = arith.addf %65, %69 : vector<8x256xf32>
    %71 = vector.broadcast %30 : vector<1x256xf32> to vector<8x256xf32>
    %72 = arith.addf %70, %71 : vector<8x256xf32>
    %cst_29 = arith.constant 0.000000e+00 : f32
    %73 = vector.broadcast %cst_29 : f32 to vector<8x256xf32>
    %74 = arith.maximumf %72, %73 : vector<8x256xf32>
    %75 = arith.maximumf %53, %74 : vector<8x256xf32>
    %c2_i32_30 = arith.constant 2 : i32
    %76 = arith.index_cast %c2_i32_30 : i32 to index
    %c0_31 = arith.constant 0 : index
    %c0_32 = arith.constant 0 : index
    %77 = vector.load %arg0[%76, %c0_31, %c0_32] : memref<16x8x8xf32, #tpu.memory_space<vmem>>, vector<1x8x8xf32>
    %78 = vector.shape_cast %77 : vector<1x8x8xf32> to vector<8x8xf32>
    %79 = vector.extract_strided_slice %78 {offsets = [0, 0], sizes = [8, 1], strides = [1, 1]} : vector<8x8xf32> to vector<8x1xf32>
    %80 = vector.broadcast %79 : vector<8x1xf32> to vector<8x256xf32>
    %81 = vector.broadcast %27 : vector<1x256xf32> to vector<8x256xf32>
    %82 = arith.mulf %80, %81 : vector<8x256xf32>
    %83 = vector.extract_strided_slice %78 {offsets = [0, 1], sizes = [8, 1], strides = [1, 1]} : vector<8x8xf32> to vector<8x1xf32>
    %84 = vector.broadcast %83 : vector<8x1xf32> to vector<8x256xf32>
    %85 = vector.broadcast %28 : vector<1x256xf32> to vector<8x256xf32>
    %86 = arith.mulf %84, %85 : vector<8x256xf32>
    %87 = arith.addf %82, %86 : vector<8x256xf32>
    %88 = vector.extract_strided_slice %78 {offsets = [0, 2], sizes = [8, 1], strides = [1, 1]} : vector<8x8xf32> to vector<8x1xf32>
    %89 = vector.broadcast %88 : vector<8x1xf32> to vector<8x256xf32>
    %90 = vector.broadcast %29 : vector<1x256xf32> to vector<8x256xf32>
    %91 = arith.mulf %89, %90 : vector<8x256xf32>
    %92 = arith.addf %87, %91 : vector<8x256xf32>
    %93 = vector.broadcast %30 : vector<1x256xf32> to vector<8x256xf32>
    %94 = arith.addf %92, %93 : vector<8x256xf32>
    %cst_33 = arith.constant 0.000000e+00 : f32
    %95 = vector.broadcast %cst_33 : f32 to vector<8x256xf32>
    %96 = arith.maximumf %94, %95 : vector<8x256xf32>
    %97 = arith.maximumf %75, %96 : vector<8x256xf32>
    %c3_i32 = arith.constant 3 : i32
    %98 = arith.index_cast %c3_i32 : i32 to index
    %c0_34 = arith.constant 0 : index
    %c0_35 = arith.constant 0 : index
    %99 = vector.load %arg0[%98, %c0_34, %c0_35] : memref<16x8x8xf32, #tpu.memory_space<vmem>>, vector<1x8x8xf32>
    %100 = vector.shape_cast %99 : vector<1x8x8xf32> to vector<8x8xf32>
    %101 = vector.extract_strided_slice %100 {offsets = [0, 0], sizes = [8, 1], strides = [1, 1]} : vector<8x8xf32> to vector<8x1xf32>
    %102 = vector.broadcast %101 : vector<8x1xf32> to vector<8x256xf32>
    %103 = vector.broadcast %27 : vector<1x256xf32> to vector<8x256xf32>
    %104 = arith.mulf %102, %103 : vector<8x256xf32>
    %105 = vector.extract_strided_slice %100 {offsets = [0, 1], sizes = [8, 1], strides = [1, 1]} : vector<8x8xf32> to vector<8x1xf32>
    %106 = vector.broadcast %105 : vector<8x1xf32> to vector<8x256xf32>
    %107 = vector.broadcast %28 : vector<1x256xf32> to vector<8x256xf32>
    %108 = arith.mulf %106, %107 : vector<8x256xf32>
    %109 = arith.addf %104, %108 : vector<8x256xf32>
    %110 = vector.extract_strided_slice %100 {offsets = [0, 2], sizes = [8, 1], strides = [1, 1]} : vector<8x8xf32> to vector<8x1xf32>
    %111 = vector.broadcast %110 : vector<8x1xf32> to vector<8x256xf32>
    %112 = vector.broadcast %29 : vector<1x256xf32> to vector<8x256xf32>
    %113 = arith.mulf %111, %112 : vector<8x256xf32>
    %114 = arith.addf %109, %113 : vector<8x256xf32>
    %115 = vector.broadcast %30 : vector<1x256xf32> to vector<8x256xf32>
    %116 = arith.addf %114, %115 : vector<8x256xf32>
    %cst_36 = arith.constant 0.000000e+00 : f32
    %117 = vector.broadcast %cst_36 : f32 to vector<8x256xf32>
    %118 = arith.maximumf %116, %117 : vector<8x256xf32>
    %119 = arith.maximumf %97, %118 : vector<8x256xf32>
    %c4_i32_37 = arith.constant 4 : i32
    %120 = arith.index_cast %c4_i32_37 : i32 to index
    %c0_38 = arith.constant 0 : index
    %c0_39 = arith.constant 0 : index
    %121 = vector.load %arg0[%120, %c0_38, %c0_39] : memref<16x8x8xf32, #tpu.memory_space<vmem>>, vector<1x8x8xf32>
    %122 = vector.shape_cast %121 : vector<1x8x8xf32> to vector<8x8xf32>
    %123 = vector.extract_strided_slice %122 {offsets = [0, 0], sizes = [8, 1], strides = [1, 1]} : vector<8x8xf32> to vector<8x1xf32>
    %124 = vector.broadcast %123 : vector<8x1xf32> to vector<8x256xf32>
    %125 = vector.broadcast %27 : vector<1x256xf32> to vector<8x256xf32>
    %126 = arith.mulf %124, %125 : vector<8x256xf32>
    %127 = vector.extract_strided_slice %122 {offsets = [0, 1], sizes = [8, 1], strides = [1, 1]} : vector<8x8xf32> to vector<8x1xf32>
    %128 = vector.broadcast %127 : vector<8x1xf32> to vector<8x256xf32>
    %129 = vector.broadcast %28 : vector<1x256xf32> to vector<8x256xf32>
    %130 = arith.mulf %128, %129 : vector<8x256xf32>
    %131 = arith.addf %126, %130 : vector<8x256xf32>
    %132 = vector.extract_strided_slice %122 {offsets = [0, 2], sizes = [8, 1], strides = [1, 1]} : vector<8x8xf32> to vector<8x1xf32>
    %133 = vector.broadcast %132 : vector<8x1xf32> to vector<8x256xf32>
    %134 = vector.broadcast %29 : vector<1x256xf32> to vector<8x256xf32>
    %135 = arith.mulf %133, %134 : vector<8x256xf32>
    %136 = arith.addf %131, %135 : vector<8x256xf32>
    %137 = vector.broadcast %30 : vector<1x256xf32> to vector<8x256xf32>
    %138 = arith.addf %136, %137 : vector<8x256xf32>
    %cst_40 = arith.constant 0.000000e+00 : f32
    %139 = vector.broadcast %cst_40 : f32 to vector<8x256xf32>
    %140 = arith.maximumf %138, %139 : vector<8x256xf32>
    %141 = arith.maximumf %119, %140 : vector<8x256xf32>
    %c5_i32 = arith.constant 5 : i32
    %142 = arith.index_cast %c5_i32 : i32 to index
    %c0_41 = arith.constant 0 : index
    %c0_42 = arith.constant 0 : index
    %143 = vector.load %arg0[%142, %c0_41, %c0_42] : memref<16x8x8xf32, #tpu.memory_space<vmem>>, vector<1x8x8xf32>
    %144 = vector.shape_cast %143 : vector<1x8x8xf32> to vector<8x8xf32>
    %145 = vector.extract_strided_slice %144 {offsets = [0, 0], sizes = [8, 1], strides = [1, 1]} : vector<8x8xf32> to vector<8x1xf32>
    %146 = vector.broadcast %145 : vector<8x1xf32> to vector<8x256xf32>
    %147 = vector.broadcast %27 : vector<1x256xf32> to vector<8x256xf32>
    %148 = arith.mulf %146, %147 : vector<8x256xf32>
    %149 = vector.extract_strided_slice %144 {offsets = [0, 1], sizes = [8, 1], strides = [1, 1]} : vector<8x8xf32> to vector<8x1xf32>
    %150 = vector.broadcast %149 : vector<8x1xf32> to vector<8x256xf32>
    %151 = vector.broadcast %28 : vector<1x256xf32> to vector<8x256xf32>
    %152 = arith.mulf %150, %151 : vector<8x256xf32>
    %153 = arith.addf %148, %152 : vector<8x256xf32>
    %154 = vector.extract_strided_slice %144 {offsets = [0, 2], sizes = [8, 1], strides = [1, 1]} : vector<8x8xf32> to vector<8x1xf32>
    %155 = vector.broadcast %154 : vector<8x1xf32> to vector<8x256xf32>
    %156 = vector.broadcast %29 : vector<1x256xf32> to vector<8x256xf32>
    %157 = arith.mulf %155, %156 : vector<8x256xf32>
    %158 = arith.addf %153, %157 : vector<8x256xf32>
    %159 = vector.broadcast %30 : vector<1x256xf32> to vector<8x256xf32>
    %160 = arith.addf %158, %159 : vector<8x256xf32>
    %cst_43 = arith.constant 0.000000e+00 : f32
    %161 = vector.broadcast %cst_43 : f32 to vector<8x256xf32>
    %162 = arith.maximumf %160, %161 : vector<8x256xf32>
    %163 = arith.maximumf %141, %162 : vector<8x256xf32>
    %c6_i32 = arith.constant 6 : i32
    %164 = arith.index_cast %c6_i32 : i32 to index
    %c0_44 = arith.constant 0 : index
    %c0_45 = arith.constant 0 : index
    %165 = vector.load %arg0[%164, %c0_44, %c0_45] : memref<16x8x8xf32, #tpu.memory_space<vmem>>, vector<1x8x8xf32>
    %166 = vector.shape_cast %165 : vector<1x8x8xf32> to vector<8x8xf32>
    %167 = vector.extract_strided_slice %166 {offsets = [0, 0], sizes = [8, 1], strides = [1, 1]} : vector<8x8xf32> to vector<8x1xf32>
    %168 = vector.broadcast %167 : vector<8x1xf32> to vector<8x256xf32>
    %169 = vector.broadcast %27 : vector<1x256xf32> to vector<8x256xf32>
    %170 = arith.mulf %168, %169 : vector<8x256xf32>
    %171 = vector.extract_strided_slice %166 {offsets = [0, 1], sizes = [8, 1], strides = [1, 1]} : vector<8x8xf32> to vector<8x1xf32>
    %172 = vector.broadcast %171 : vector<8x1xf32> to vector<8x256xf32>
    %173 = vector.broadcast %28 : vector<1x256xf32> to vector<8x256xf32>
    %174 = arith.mulf %172, %173 : vector<8x256xf32>
    %175 = arith.addf %170, %174 : vector<8x256xf32>
    %176 = vector.extract_strided_slice %166 {offsets = [0, 2], sizes = [8, 1], strides = [1, 1]} : vector<8x8xf32> to vector<8x1xf32>
    %177 = vector.broadcast %176 : vector<8x1xf32> to vector<8x256xf32>
    %178 = vector.broadcast %29 : vector<1x256xf32> to vector<8x256xf32>
    %179 = arith.mulf %177, %178 : vector<8x256xf32>
    %180 = arith.addf %175, %179 : vector<8x256xf32>
    %181 = vector.broadcast %30 : vector<1x256xf32> to vector<8x256xf32>
    %182 = arith.addf %180, %181 : vector<8x256xf32>
    %cst_46 = arith.constant 0.000000e+00 : f32
    %183 = vector.broadcast %cst_46 : f32 to vector<8x256xf32>
    %184 = arith.maximumf %182, %183 : vector<8x256xf32>
    %185 = arith.maximumf %163, %184 : vector<8x256xf32>
    %c7_i32 = arith.constant 7 : i32
    %186 = arith.index_cast %c7_i32 : i32 to index
    %c0_47 = arith.constant 0 : index
    %c0_48 = arith.constant 0 : index
    %187 = vector.load %arg0[%186, %c0_47, %c0_48] : memref<16x8x8xf32, #tpu.memory_space<vmem>>, vector<1x8x8xf32>
    %188 = vector.shape_cast %187 : vector<1x8x8xf32> to vector<8x8xf32>
    %189 = vector.extract_strided_slice %188 {offsets = [0, 0], sizes = [8, 1], strides = [1, 1]} : vector<8x8xf32> to vector<8x1xf32>
    %190 = vector.broadcast %189 : vector<8x1xf32> to vector<8x256xf32>
    %191 = vector.broadcast %27 : vector<1x256xf32> to vector<8x256xf32>
    %192 = arith.mulf %190, %191 : vector<8x256xf32>
    %193 = vector.extract_strided_slice %188 {offsets = [0, 1], sizes = [8, 1], strides = [1, 1]} : vector<8x8xf32> to vector<8x1xf32>
    %194 = vector.broadcast %193 : vector<8x1xf32> to vector<8x256xf32>
    %195 = vector.broadcast %28 : vector<1x256xf32> to vector<8x256xf32>
    %196 = arith.mulf %194, %195 : vector<8x256xf32>
    %197 = arith.addf %192, %196 : vector<8x256xf32>
    %198 = vector.extract_strided_slice %188 {offsets = [0, 2], sizes = [8, 1], strides = [1, 1]} : vector<8x8xf32> to vector<8x1xf32>
    %199 = vector.broadcast %198 : vector<8x1xf32> to vector<8x256xf32>
    %200 = vector.broadcast %29 : vector<1x256xf32> to vector<8x256xf32>
    %201 = arith.mulf %199, %200 : vector<8x256xf32>
    %202 = arith.addf %197, %201 : vector<8x256xf32>
    %203 = vector.broadcast %30 : vector<1x256xf32> to vector<8x256xf32>
    %204 = arith.addf %202, %203 : vector<8x256xf32>
    %cst_49 = arith.constant 0.000000e+00 : f32
    %205 = vector.broadcast %cst_49 : f32 to vector<8x256xf32>
    %206 = arith.maximumf %204, %205 : vector<8x256xf32>
    %207 = arith.maximumf %185, %206 : vector<8x256xf32>
    %c8_i32 = arith.constant 8 : i32
    %208 = arith.index_cast %c8_i32 : i32 to index
    %c0_50 = arith.constant 0 : index
    %c0_51 = arith.constant 0 : index
    %209 = vector.load %arg0[%208, %c0_50, %c0_51] : memref<16x8x8xf32, #tpu.memory_space<vmem>>, vector<1x8x8xf32>
    %210 = vector.shape_cast %209 : vector<1x8x8xf32> to vector<8x8xf32>
    %211 = vector.extract_strided_slice %210 {offsets = [0, 0], sizes = [8, 1], strides = [1, 1]} : vector<8x8xf32> to vector<8x1xf32>
    %212 = vector.broadcast %211 : vector<8x1xf32> to vector<8x256xf32>
    %213 = vector.broadcast %27 : vector<1x256xf32> to vector<8x256xf32>
    %214 = arith.mulf %212, %213 : vector<8x256xf32>
    %215 = vector.extract_strided_slice %210 {offsets = [0, 1], sizes = [8, 1], strides = [1, 1]} : vector<8x8xf32> to vector<8x1xf32>
    %216 = vector.broadcast %215 : vector<8x1xf32> to vector<8x256xf32>
    %217 = vector.broadcast %28 : vector<1x256xf32> to vector<8x256xf32>
    %218 = arith.mulf %216, %217 : vector<8x256xf32>
    %219 = arith.addf %214, %218 : vector<8x256xf32>
    %220 = vector.extract_strided_slice %210 {offsets = [0, 2], sizes = [8, 1], strides = [1, 1]} : vector<8x8xf32> to vector<8x1xf32>
    %221 = vector.broadcast %220 : vector<8x1xf32> to vector<8x256xf32>
    %222 = vector.broadcast %29 : vector<1x256xf32> to vector<8x256xf32>
    %223 = arith.mulf %221, %222 : vector<8x256xf32>
    %224 = arith.addf %219, %223 : vector<8x256xf32>
    %225 = vector.broadcast %30 : vector<1x256xf32> to vector<8x256xf32>
    %226 = arith.addf %224, %225 : vector<8x256xf32>
    %cst_52 = arith.constant 0.000000e+00 : f32
    %227 = vector.broadcast %cst_52 : f32 to vector<8x256xf32>
    %228 = arith.maximumf %226, %227 : vector<8x256xf32>
    %229 = arith.maximumf %207, %228 : vector<8x256xf32>
    %c9_i32 = arith.constant 9 : i32
    %230 = arith.index_cast %c9_i32 : i32 to index
    %c0_53 = arith.constant 0 : index
    %c0_54 = arith.constant 0 : index
    %231 = vector.load %arg0[%230, %c0_53, %c0_54] : memref<16x8x8xf32, #tpu.memory_space<vmem>>, vector<1x8x8xf32>
    %232 = vector.shape_cast %231 : vector<1x8x8xf32> to vector<8x8xf32>
    %233 = vector.extract_strided_slice %232 {offsets = [0, 0], sizes = [8, 1], strides = [1, 1]} : vector<8x8xf32> to vector<8x1xf32>
    %234 = vector.broadcast %233 : vector<8x1xf32> to vector<8x256xf32>
    %235 = vector.broadcast %27 : vector<1x256xf32> to vector<8x256xf32>
    %236 = arith.mulf %234, %235 : vector<8x256xf32>
    %237 = vector.extract_strided_slice %232 {offsets = [0, 1], sizes = [8, 1], strides = [1, 1]} : vector<8x8xf32> to vector<8x1xf32>
    %238 = vector.broadcast %237 : vector<8x1xf32> to vector<8x256xf32>
    %239 = vector.broadcast %28 : vector<1x256xf32> to vector<8x256xf32>
    %240 = arith.mulf %238, %239 : vector<8x256xf32>
    %241 = arith.addf %236, %240 : vector<8x256xf32>
    %242 = vector.extract_strided_slice %232 {offsets = [0, 2], sizes = [8, 1], strides = [1, 1]} : vector<8x8xf32> to vector<8x1xf32>
    %243 = vector.broadcast %242 : vector<8x1xf32> to vector<8x256xf32>
    %244 = vector.broadcast %29 : vector<1x256xf32> to vector<8x256xf32>
    %245 = arith.mulf %243, %244 : vector<8x256xf32>
    %246 = arith.addf %241, %245 : vector<8x256xf32>
    %247 = vector.broadcast %30 : vector<1x256xf32> to vector<8x256xf32>
    %248 = arith.addf %246, %247 : vector<8x256xf32>
    %cst_55 = arith.constant 0.000000e+00 : f32
    %249 = vector.broadcast %cst_55 : f32 to vector<8x256xf32>
    %250 = arith.maximumf %248, %249 : vector<8x256xf32>
    %251 = arith.maximumf %229, %250 : vector<8x256xf32>
    %c10_i32 = arith.constant 10 : i32
    %252 = arith.index_cast %c10_i32 : i32 to index
    %c0_56 = arith.constant 0 : index
    %c0_57 = arith.constant 0 : index
    %253 = vector.load %arg0[%252, %c0_56, %c0_57] : memref<16x8x8xf32, #tpu.memory_space<vmem>>, vector<1x8x8xf32>
    %254 = vector.shape_cast %253 : vector<1x8x8xf32> to vector<8x8xf32>
    %255 = vector.extract_strided_slice %254 {offsets = [0, 0], sizes = [8, 1], strides = [1, 1]} : vector<8x8xf32> to vector<8x1xf32>
    %256 = vector.broadcast %255 : vector<8x1xf32> to vector<8x256xf32>
    %257 = vector.broadcast %27 : vector<1x256xf32> to vector<8x256xf32>
    %258 = arith.mulf %256, %257 : vector<8x256xf32>
    %259 = vector.extract_strided_slice %254 {offsets = [0, 1], sizes = [8, 1], strides = [1, 1]} : vector<8x8xf32> to vector<8x1xf32>
    %260 = vector.broadcast %259 : vector<8x1xf32> to vector<8x256xf32>
    %261 = vector.broadcast %28 : vector<1x256xf32> to vector<8x256xf32>
    %262 = arith.mulf %260, %261 : vector<8x256xf32>
    %263 = arith.addf %258, %262 : vector<8x256xf32>
    %264 = vector.extract_strided_slice %254 {offsets = [0, 2], sizes = [8, 1], strides = [1, 1]} : vector<8x8xf32> to vector<8x1xf32>
    %265 = vector.broadcast %264 : vector<8x1xf32> to vector<8x256xf32>
    %266 = vector.broadcast %29 : vector<1x256xf32> to vector<8x256xf32>
    %267 = arith.mulf %265, %266 : vector<8x256xf32>
    %268 = arith.addf %263, %267 : vector<8x256xf32>
    %269 = vector.broadcast %30 : vector<1x256xf32> to vector<8x256xf32>
    %270 = arith.addf %268, %269 : vector<8x256xf32>
    %cst_58 = arith.constant 0.000000e+00 : f32
    %271 = vector.broadcast %cst_58 : f32 to vector<8x256xf32>
    %272 = arith.maximumf %270, %271 : vector<8x256xf32>
    %273 = arith.maximumf %251, %272 : vector<8x256xf32>
    %c11_i32 = arith.constant 11 : i32
    %274 = arith.index_cast %c11_i32 : i32 to index
    %c0_59 = arith.constant 0 : index
    %c0_60 = arith.constant 0 : index
    %275 = vector.load %arg0[%274, %c0_59, %c0_60] : memref<16x8x8xf32, #tpu.memory_space<vmem>>, vector<1x8x8xf32>
    %276 = vector.shape_cast %275 : vector<1x8x8xf32> to vector<8x8xf32>
    %277 = vector.extract_strided_slice %276 {offsets = [0, 0], sizes = [8, 1], strides = [1, 1]} : vector<8x8xf32> to vector<8x1xf32>
    %278 = vector.broadcast %277 : vector<8x1xf32> to vector<8x256xf32>
    %279 = vector.broadcast %27 : vector<1x256xf32> to vector<8x256xf32>
    %280 = arith.mulf %278, %279 : vector<8x256xf32>
    %281 = vector.extract_strided_slice %276 {offsets = [0, 1], sizes = [8, 1], strides = [1, 1]} : vector<8x8xf32> to vector<8x1xf32>
    %282 = vector.broadcast %281 : vector<8x1xf32> to vector<8x256xf32>
    %283 = vector.broadcast %28 : vector<1x256xf32> to vector<8x256xf32>
    %284 = arith.mulf %282, %283 : vector<8x256xf32>
    %285 = arith.addf %280, %284 : vector<8x256xf32>
    %286 = vector.extract_strided_slice %276 {offsets = [0, 2], sizes = [8, 1], strides = [1, 1]} : vector<8x8xf32> to vector<8x1xf32>
    %287 = vector.broadcast %286 : vector<8x1xf32> to vector<8x256xf32>
    %288 = vector.broadcast %29 : vector<1x256xf32> to vector<8x256xf32>
    %289 = arith.mulf %287, %288 : vector<8x256xf32>
    %290 = arith.addf %285, %289 : vector<8x256xf32>
    %291 = vector.broadcast %30 : vector<1x256xf32> to vector<8x256xf32>
    %292 = arith.addf %290, %291 : vector<8x256xf32>
    %cst_61 = arith.constant 0.000000e+00 : f32
    %293 = vector.broadcast %cst_61 : f32 to vector<8x256xf32>
    %294 = arith.maximumf %292, %293 : vector<8x256xf32>
    %295 = arith.maximumf %273, %294 : vector<8x256xf32>
    %c12_i32 = arith.constant 12 : i32
    %296 = arith.index_cast %c12_i32 : i32 to index
    %c0_62 = arith.constant 0 : index
    %c0_63 = arith.constant 0 : index
    %297 = vector.load %arg0[%296, %c0_62, %c0_63] : memref<16x8x8xf32, #tpu.memory_space<vmem>>, vector<1x8x8xf32>
    %298 = vector.shape_cast %297 : vector<1x8x8xf32> to vector<8x8xf32>
    %299 = vector.extract_strided_slice %298 {offsets = [0, 0], sizes = [8, 1], strides = [1, 1]} : vector<8x8xf32> to vector<8x1xf32>
    %300 = vector.broadcast %299 : vector<8x1xf32> to vector<8x256xf32>
    %301 = vector.broadcast %27 : vector<1x256xf32> to vector<8x256xf32>
    %302 = arith.mulf %300, %301 : vector<8x256xf32>
    %303 = vector.extract_strided_slice %298 {offsets = [0, 1], sizes = [8, 1], strides = [1, 1]} : vector<8x8xf32> to vector<8x1xf32>
    %304 = vector.broadcast %303 : vector<8x1xf32> to vector<8x256xf32>
    %305 = vector.broadcast %28 : vector<1x256xf32> to vector<8x256xf32>
    %306 = arith.mulf %304, %305 : vector<8x256xf32>
    %307 = arith.addf %302, %306 : vector<8x256xf32>
    %308 = vector.extract_strided_slice %298 {offsets = [0, 2], sizes = [8, 1], strides = [1, 1]} : vector<8x8xf32> to vector<8x1xf32>
    %309 = vector.broadcast %308 : vector<8x1xf32> to vector<8x256xf32>
    %310 = vector.broadcast %29 : vector<1x256xf32> to vector<8x256xf32>
    %311 = arith.mulf %309, %310 : vector<8x256xf32>
    %312 = arith.addf %307, %311 : vector<8x256xf32>
    %313 = vector.broadcast %30 : vector<1x256xf32> to vector<8x256xf32>
    %314 = arith.addf %312, %313 : vector<8x256xf32>
    %cst_64 = arith.constant 0.000000e+00 : f32
    %315 = vector.broadcast %cst_64 : f32 to vector<8x256xf32>
    %316 = arith.maximumf %314, %315 : vector<8x256xf32>
    %317 = arith.maximumf %295, %316 : vector<8x256xf32>
    %c13_i32 = arith.constant 13 : i32
    %318 = arith.index_cast %c13_i32 : i32 to index
    %c0_65 = arith.constant 0 : index
    %c0_66 = arith.constant 0 : index
    %319 = vector.load %arg0[%318, %c0_65, %c0_66] : memref<16x8x8xf32, #tpu.memory_space<vmem>>, vector<1x8x8xf32>
    %320 = vector.shape_cast %319 : vector<1x8x8xf32> to vector<8x8xf32>
    %321 = vector.extract_strided_slice %320 {offsets = [0, 0], sizes = [8, 1], strides = [1, 1]} : vector<8x8xf32> to vector<8x1xf32>
    %322 = vector.broadcast %321 : vector<8x1xf32> to vector<8x256xf32>
    %323 = vector.broadcast %27 : vector<1x256xf32> to vector<8x256xf32>
    %324 = arith.mulf %322, %323 : vector<8x256xf32>
    %325 = vector.extract_strided_slice %320 {offsets = [0, 1], sizes = [8, 1], strides = [1, 1]} : vector<8x8xf32> to vector<8x1xf32>
    %326 = vector.broadcast %325 : vector<8x1xf32> to vector<8x256xf32>
    %327 = vector.broadcast %28 : vector<1x256xf32> to vector<8x256xf32>
    %328 = arith.mulf %326, %327 : vector<8x256xf32>
    %329 = arith.addf %324, %328 : vector<8x256xf32>
    %330 = vector.extract_strided_slice %320 {offsets = [0, 2], sizes = [8, 1], strides = [1, 1]} : vector<8x8xf32> to vector<8x1xf32>
    %331 = vector.broadcast %330 : vector<8x1xf32> to vector<8x256xf32>
    %332 = vector.broadcast %29 : vector<1x256xf32> to vector<8x256xf32>
    %333 = arith.mulf %331, %332 : vector<8x256xf32>
    %334 = arith.addf %329, %333 : vector<8x256xf32>
    %335 = vector.broadcast %30 : vector<1x256xf32> to vector<8x256xf32>
    %336 = arith.addf %334, %335 : vector<8x256xf32>
    %cst_67 = arith.constant 0.000000e+00 : f32
    %337 = vector.broadcast %cst_67 : f32 to vector<8x256xf32>
    %338 = arith.maximumf %336, %337 : vector<8x256xf32>
    %339 = arith.maximumf %317, %338 : vector<8x256xf32>
    %c14_i32 = arith.constant 14 : i32
    %340 = arith.index_cast %c14_i32 : i32 to index
    %c0_68 = arith.constant 0 : index
    %c0_69 = arith.constant 0 : index
    %341 = vector.load %arg0[%340, %c0_68, %c0_69] : memref<16x8x8xf32, #tpu.memory_space<vmem>>, vector<1x8x8xf32>
    %342 = vector.shape_cast %341 : vector<1x8x8xf32> to vector<8x8xf32>
    %343 = vector.extract_strided_slice %342 {offsets = [0, 0], sizes = [8, 1], strides = [1, 1]} : vector<8x8xf32> to vector<8x1xf32>
    %344 = vector.broadcast %343 : vector<8x1xf32> to vector<8x256xf32>
    %345 = vector.broadcast %27 : vector<1x256xf32> to vector<8x256xf32>
    %346 = arith.mulf %344, %345 : vector<8x256xf32>
    %347 = vector.extract_strided_slice %342 {offsets = [0, 1], sizes = [8, 1], strides = [1, 1]} : vector<8x8xf32> to vector<8x1xf32>
    %348 = vector.broadcast %347 : vector<8x1xf32> to vector<8x256xf32>
    %349 = vector.broadcast %28 : vector<1x256xf32> to vector<8x256xf32>
    %350 = arith.mulf %348, %349 : vector<8x256xf32>
    %351 = arith.addf %346, %350 : vector<8x256xf32>
    %352 = vector.extract_strided_slice %342 {offsets = [0, 2], sizes = [8, 1], strides = [1, 1]} : vector<8x8xf32> to vector<8x1xf32>
    %353 = vector.broadcast %352 : vector<8x1xf32> to vector<8x256xf32>
    %354 = vector.broadcast %29 : vector<1x256xf32> to vector<8x256xf32>
    %355 = arith.mulf %353, %354 : vector<8x256xf32>
    %356 = arith.addf %351, %355 : vector<8x256xf32>
    %357 = vector.broadcast %30 : vector<1x256xf32> to vector<8x256xf32>
    %358 = arith.addf %356, %357 : vector<8x256xf32>
    %cst_70 = arith.constant 0.000000e+00 : f32
    %359 = vector.broadcast %cst_70 : f32 to vector<8x256xf32>
    %360 = arith.maximumf %358, %359 : vector<8x256xf32>
    %361 = arith.maximumf %339, %360 : vector<8x256xf32>
    %c15_i32 = arith.constant 15 : i32
    %362 = arith.index_cast %c15_i32 : i32 to index
    %c0_71 = arith.constant 0 : index
    %c0_72 = arith.constant 0 : index
    %363 = vector.load %arg0[%362, %c0_71, %c0_72] : memref<16x8x8xf32, #tpu.memory_space<vmem>>, vector<1x8x8xf32>
    %364 = vector.shape_cast %363 : vector<1x8x8xf32> to vector<8x8xf32>
    %365 = vector.extract_strided_slice %364 {offsets = [0, 0], sizes = [8, 1], strides = [1, 1]} : vector<8x8xf32> to vector<8x1xf32>
    %366 = vector.broadcast %365 : vector<8x1xf32> to vector<8x256xf32>
    %367 = vector.broadcast %27 : vector<1x256xf32> to vector<8x256xf32>
    %368 = arith.mulf %366, %367 : vector<8x256xf32>
    %369 = vector.extract_strided_slice %364 {offsets = [0, 1], sizes = [8, 1], strides = [1, 1]} : vector<8x8xf32> to vector<8x1xf32>
    %370 = vector.broadcast %369 : vector<8x1xf32> to vector<8x256xf32>
    %371 = vector.broadcast %28 : vector<1x256xf32> to vector<8x256xf32>
    %372 = arith.mulf %370, %371 : vector<8x256xf32>
    %373 = arith.addf %368, %372 : vector<8x256xf32>
    %374 = vector.extract_strided_slice %364 {offsets = [0, 2], sizes = [8, 1], strides = [1, 1]} : vector<8x8xf32> to vector<8x1xf32>
    %375 = vector.broadcast %374 : vector<8x1xf32> to vector<8x256xf32>
    %376 = vector.broadcast %29 : vector<1x256xf32> to vector<8x256xf32>
    %377 = arith.mulf %375, %376 : vector<8x256xf32>
    %378 = arith.addf %373, %377 : vector<8x256xf32>
    %379 = vector.broadcast %30 : vector<1x256xf32> to vector<8x256xf32>
    %380 = arith.addf %378, %379 : vector<8x256xf32>
    %cst_73 = arith.constant 0.000000e+00 : f32
    %381 = vector.broadcast %cst_73 : f32 to vector<8x256xf32>
    %382 = arith.maximumf %380, %381 : vector<8x256xf32>
    %383 = arith.maximumf %361, %382 : vector<8x256xf32>
    %c16_i32 = arith.constant 16 : i32
    %384 = vector.extract_strided_slice %383 {offsets = [0, 0], sizes = [8, 128], strides = [1, 1]} : vector<8x256xf32> to vector<8x128xf32>
    %385 = vector.extract_strided_slice %383 {offsets = [0, 128], sizes = [8, 128], strides = [1, 1]} : vector<8x256xf32> to vector<8x128xf32>
    %386 = vector.extract_strided_slice %18 {offsets = [1, 0], sizes = [1, 256], strides = [1, 1]} : vector<16x256xf32> to vector<1x256xf32>
    %387 = vector.extract_strided_slice %18 {offsets = [2, 0], sizes = [1, 256], strides = [1, 1]} : vector<16x256xf32> to vector<1x256xf32>
    %388 = vector.extract_strided_slice %18 {offsets = [3, 0], sizes = [1, 256], strides = [1, 1]} : vector<16x256xf32> to vector<1x256xf32>
    %389 = vector.extract_strided_slice %18 {offsets = [4, 0], sizes = [1, 128], strides = [1, 1]} : vector<16x256xf32> to vector<1x128xf32>
    %390 = arith.truncf %384 : vector<8x128xf32> to vector<8x128xbf16>
    %c0_74 = arith.constant 0 : index
    %c0_75 = arith.constant 0 : index
    %c0_76 = arith.constant 0 : index
    %391 = vector.load %arg2[%c0_74, %c0_75, %c0_76] : memref<3x128x256xbf16, #tpu.memory_space<vmem>>, vector<1x128x256xbf16>
    %392 = vector.shape_cast %391 : vector<1x128x256xbf16> to vector<128x256xbf16>
    %cst_77 = arith.constant dense<0.000000e+00> : vector<8x256xf32>
    %393 = tpu.matmul %390, %392, %cst_77 {dimension_numbers = #tpu.dot_dimension_numbers<[1], [0], [0], [1], [0, 0, 1, 1], [], []>} : vector<8x128xbf16>, vector<128x256xbf16>, vector<8x256xf32> -> vector<8x256xf32>
    %394 = vector.broadcast %386 : vector<1x256xf32> to vector<8x256xf32>
    %395 = arith.addf %393, %394 : vector<8x256xf32>
    %cst_78 = arith.constant dense<0.000000e+00> : vector<256xf32>
    %396 = vector.multi_reduction <add>, %395, %cst_78 [0] : vector<8x256xf32> to vector<256xf32>
    %397 = vector.shape_cast %396 : vector<256xf32> to vector<1x256xf32>
    %398 = vector.broadcast %23 : vector<8x1xf32> to vector<8x256xf32>
    %399 = arith.mulf %395, %398 : vector<8x256xf32>
    %cst_79 = arith.constant dense<0.000000e+00> : vector<256xf32>
    %400 = vector.multi_reduction <add>, %399, %cst_79 [0] : vector<8x256xf32> to vector<256xf32>
    %401 = vector.shape_cast %400 : vector<256xf32> to vector<1x256xf32>
    %cst_80 = arith.constant 2.500000e-01 : f32
    %402 = vector.broadcast %cst_80 : f32 to vector<1x256xf32>
    %403 = arith.mulf %401, %402 : vector<1x256xf32>
    %404 = vector.broadcast %23 : vector<8x1xf32> to vector<8x256xf32>
    %405 = vector.broadcast %403 : vector<1x256xf32> to vector<8x256xf32>
    %406 = arith.mulf %404, %405 : vector<8x256xf32>
    %407 = arith.subf %397, %401 : vector<1x256xf32>
    %cst_81 = arith.constant 2.500000e-01 : f32
    %408 = vector.broadcast %cst_81 : f32 to vector<1x256xf32>
    %409 = arith.mulf %407, %408 : vector<1x256xf32>
    %410 = vector.broadcast %25 : vector<8x1xf32> to vector<8x256xf32>
    %411 = vector.broadcast %409 : vector<1x256xf32> to vector<8x256xf32>
    %412 = arith.mulf %410, %411 : vector<8x256xf32>
    %413 = arith.addf %406, %412 : vector<8x256xf32>
    %414 = arith.subf %395, %413 : vector<8x256xf32>
    %415 = arith.mulf %414, %414 : vector<8x256xf32>
    %cst_82 = arith.constant dense<0.000000e+00> : vector<256xf32>
    %416 = vector.multi_reduction <add>, %415, %cst_82 [0] : vector<8x256xf32> to vector<256xf32>
    %417 = vector.shape_cast %416 : vector<256xf32> to vector<1x256xf32>
    %418 = vector.broadcast %23 : vector<8x1xf32> to vector<8x256xf32>
    %419 = arith.mulf %415, %418 : vector<8x256xf32>
    %cst_83 = arith.constant dense<0.000000e+00> : vector<256xf32>
    %420 = vector.multi_reduction <add>, %419, %cst_83 [0] : vector<8x256xf32> to vector<256xf32>
    %421 = vector.shape_cast %420 : vector<256xf32> to vector<1x256xf32>
    %cst_84 = arith.constant 2.500000e-01 : f32
    %422 = vector.broadcast %cst_84 : f32 to vector<1x256xf32>
    %423 = arith.mulf %421, %422 : vector<1x256xf32>
    %424 = vector.broadcast %23 : vector<8x1xf32> to vector<8x256xf32>
    %425 = vector.broadcast %423 : vector<1x256xf32> to vector<8x256xf32>
    %426 = arith.mulf %424, %425 : vector<8x256xf32>
    %427 = arith.subf %417, %421 : vector<1x256xf32>
    %cst_85 = arith.constant 2.500000e-01 : f32
    %428 = vector.broadcast %cst_85 : f32 to vector<1x256xf32>
    %429 = arith.mulf %427, %428 : vector<1x256xf32>
    %430 = vector.broadcast %25 : vector<8x1xf32> to vector<8x256xf32>
    %431 = vector.broadcast %429 : vector<1x256xf32> to vector<8x256xf32>
    %432 = arith.mulf %430, %431 : vector<8x256xf32>
    %433 = arith.addf %426, %432 : vector<8x256xf32>
    %434 = vector.broadcast %387 : vector<1x256xf32> to vector<8x256xf32>
    %435 = arith.mulf %434, %414 : vector<8x256xf32>
    %cst_86 = arith.constant 9.99999974E-6 : f32
    %436 = vector.broadcast %cst_86 : f32 to vector<8x256xf32>
    %437 = arith.addf %433, %436 : vector<8x256xf32>
    %438 = math.rsqrt %437 : vector<8x256xf32>
    %439 = arith.mulf %435, %438 : vector<8x256xf32>
    %440 = vector.broadcast %388 : vector<1x256xf32> to vector<8x256xf32>
    %441 = arith.addf %439, %440 : vector<8x256xf32>
    %cst_87 = arith.constant 0.000000e+00 : f32
    %442 = vector.broadcast %cst_87 : f32 to vector<8x256xf32>
    %443 = arith.maximumf %441, %442 : vector<8x256xf32>
    %c0_i32_88 = arith.constant 0 : i32
    %c0_i32_89 = arith.constant 0 : i32
    %c0_i32_90 = arith.constant 0 : i32
    %c0_i32_91 = arith.constant 0 : i32
    %c0_i32_92 = arith.constant 0 : i32
    %444 = tpu.memref_slice %arg3[%c0_i32_88, %c0_i32_91, %c0_i32_92] : memref<3x256x128xbf16, #tpu.memory_space<any>> -> memref<1x256x128xbf16, #tpu.memory_space<any>>
    %445 = tpu.memref_squeeze %444 : memref<1x256x128xbf16, #tpu.memory_space<any>> -> memref<256x128xbf16, #tpu.memory_space<any>>
    %c0_i32_93 = arith.constant 0 : i32
    %c0_i32_94 = arith.constant 0 : i32
    %446 = tpu.memref_slice %arg6[%c0_i32_89, %c0_i32_93, %c0_i32_94] : memref<3x256x128xbf16, #tpu.memory_space<vmem>> -> memref<1x256x128xbf16, #tpu.memory_space<vmem>>
    %447 = tpu.memref_squeeze %446 : memref<1x256x128xbf16, #tpu.memory_space<vmem>> -> memref<256x128xbf16, #tpu.memory_space<vmem>>
    %448 = tpu.memref_slice %arg7[%c0_i32_90] : memref<3x!tpu.dma_semaphore, #tpu.memory_space<semaphore_mem>> -> memref<1x!tpu.dma_semaphore, #tpu.memory_space<semaphore_mem>>
    %449 = tpu.memref_squeeze %448 : memref<1x!tpu.dma_semaphore, #tpu.memory_space<semaphore_mem>> -> memref<!tpu.dma_semaphore, #tpu.memory_space<semaphore_mem>>
    tpu.wait_dma2 semaphore(%449 : memref<!tpu.dma_semaphore, #tpu.memory_space<semaphore_mem>>) src(%445 : memref<256x128xbf16, #tpu.memory_space<any>>) dst(%447 : memref<256x128xbf16, #tpu.memory_space<vmem>>)
    %450 = arith.truncf %443 : vector<8x256xf32> to vector<8x256xbf16>
    %c0_95 = arith.constant 0 : index
    %c0_96 = arith.constant 0 : index
    %c0_97 = arith.constant 0 : index
    %451 = vector.load %arg6[%c0_95, %c0_96, %c0_97] : memref<3x256x128xbf16, #tpu.memory_space<vmem>>, vector<1x256x128xbf16>
    %452 = vector.shape_cast %451 : vector<1x256x128xbf16> to vector<256x128xbf16>
    %cst_98 = arith.constant dense<0.000000e+00> : vector<8x128xf32>
    %453 = tpu.matmul %450, %452, %cst_98 {dimension_numbers = #tpu.dot_dimension_numbers<[1], [0], [0], [1], [0, 0, 1, 1], [], []>} : vector<8x256xbf16>, vector<256x128xbf16>, vector<8x128xf32> -> vector<8x128xf32>
    %454 = vector.broadcast %389 : vector<1x128xf32> to vector<8x128xf32>
    %455 = arith.addf %453, %454 : vector<8x128xf32>
    %456 = vector.extract_strided_slice %18 {offsets = [5, 0], sizes = [1, 256], strides = [1, 1]} : vector<16x256xf32> to vector<1x256xf32>
    %457 = vector.extract_strided_slice %18 {offsets = [6, 0], sizes = [1, 256], strides = [1, 1]} : vector<16x256xf32> to vector<1x256xf32>
    %458 = vector.extract_strided_slice %18 {offsets = [7, 0], sizes = [1, 256], strides = [1, 1]} : vector<16x256xf32> to vector<1x256xf32>
    %459 = vector.extract_strided_slice %18 {offsets = [8, 0], sizes = [1, 128], strides = [1, 1]} : vector<16x256xf32> to vector<1x128xf32>
    %460 = arith.truncf %455 : vector<8x128xf32> to vector<8x128xbf16>
    %c1 = arith.constant 1 : index
    %c0_99 = arith.constant 0 : index
    %c0_100 = arith.constant 0 : index
    %461 = vector.load %arg2[%c1, %c0_99, %c0_100] : memref<3x128x256xbf16, #tpu.memory_space<vmem>>, vector<1x128x256xbf16>
    %462 = vector.shape_cast %461 : vector<1x128x256xbf16> to vector<128x256xbf16>
    %cst_101 = arith.constant dense<0.000000e+00> : vector<8x256xf32>
    %463 = tpu.matmul %460, %462, %cst_101 {dimension_numbers = #tpu.dot_dimension_numbers<[1], [0], [0], [1], [0, 0, 1, 1], [], []>} : vector<8x128xbf16>, vector<128x256xbf16>, vector<8x256xf32> -> vector<8x256xf32>
    %464 = vector.broadcast %456 : vector<1x256xf32> to vector<8x256xf32>
    %465 = arith.addf %463, %464 : vector<8x256xf32>
    %cst_102 = arith.constant dense<0.000000e+00> : vector<256xf32>
    %466 = vector.multi_reduction <add>, %465, %cst_102 [0] : vector<8x256xf32> to vector<256xf32>
    %467 = vector.shape_cast %466 : vector<256xf32> to vector<1x256xf32>
    %468 = vector.broadcast %23 : vector<8x1xf32> to vector<8x256xf32>
    %469 = arith.mulf %465, %468 : vector<8x256xf32>
    %cst_103 = arith.constant dense<0.000000e+00> : vector<256xf32>
    %470 = vector.multi_reduction <add>, %469, %cst_103 [0] : vector<8x256xf32> to vector<256xf32>
    %471 = vector.shape_cast %470 : vector<256xf32> to vector<1x256xf32>
    %cst_104 = arith.constant 2.500000e-01 : f32
    %472 = vector.broadcast %cst_104 : f32 to vector<1x256xf32>
    %473 = arith.mulf %471, %472 : vector<1x256xf32>
    %474 = vector.broadcast %23 : vector<8x1xf32> to vector<8x256xf32>
    %475 = vector.broadcast %473 : vector<1x256xf32> to vector<8x256xf32>
    %476 = arith.mulf %474, %475 : vector<8x256xf32>
    %477 = arith.subf %467, %471 : vector<1x256xf32>
    %cst_105 = arith.constant 2.500000e-01 : f32
    %478 = vector.broadcast %cst_105 : f32 to vector<1x256xf32>
    %479 = arith.mulf %477, %478 : vector<1x256xf32>
    %480 = vector.broadcast %25 : vector<8x1xf32> to vector<8x256xf32>
    %481 = vector.broadcast %479 : vector<1x256xf32> to vector<8x256xf32>
    %482 = arith.mulf %480, %481 : vector<8x256xf32>
    %483 = arith.addf %476, %482 : vector<8x256xf32>
    %484 = arith.subf %465, %483 : vector<8x256xf32>
    %485 = arith.mulf %484, %484 : vector<8x256xf32>
    %cst_106 = arith.constant dense<0.000000e+00> : vector<256xf32>
    %486 = vector.multi_reduction <add>, %485, %cst_106 [0] : vector<8x256xf32> to vector<256xf32>
    %487 = vector.shape_cast %486 : vector<256xf32> to vector<1x256xf32>
    %488 = vector.broadcast %23 : vector<8x1xf32> to vector<8x256xf32>
    %489 = arith.mulf %485, %488 : vector<8x256xf32>
    %cst_107 = arith.constant dense<0.000000e+00> : vector<256xf32>
    %490 = vector.multi_reduction <add>, %489, %cst_107 [0] : vector<8x256xf32> to vector<256xf32>
    %491 = vector.shape_cast %490 : vector<256xf32> to vector<1x256xf32>
    %cst_108 = arith.constant 2.500000e-01 : f32
    %492 = vector.broadcast %cst_108 : f32 to vector<1x256xf32>
    %493 = arith.mulf %491, %492 : vector<1x256xf32>
    %494 = vector.broadcast %23 : vector<8x1xf32> to vector<8x256xf32>
    %495 = vector.broadcast %493 : vector<1x256xf32> to vector<8x256xf32>
    %496 = arith.mulf %494, %495 : vector<8x256xf32>
    %497 = arith.subf %487, %491 : vector<1x256xf32>
    %cst_109 = arith.constant 2.500000e-01 : f32
    %498 = vector.broadcast %cst_109 : f32 to vector<1x256xf32>
    %499 = arith.mulf %497, %498 : vector<1x256xf32>
    %500 = vector.broadcast %25 : vector<8x1xf32> to vector<8x256xf32>
    %501 = vector.broadcast %499 : vector<1x256xf32> to vector<8x256xf32>
    %502 = arith.mulf %500, %501 : vector<8x256xf32>
    %503 = arith.addf %496, %502 : vector<8x256xf32>
    %504 = vector.broadcast %457 : vector<1x256xf32> to vector<8x256xf32>
    %505 = arith.mulf %504, %484 : vector<8x256xf32>
    %cst_110 = arith.constant 9.99999974E-6 : f32
    %506 = vector.broadcast %cst_110 : f32 to vector<8x256xf32>
    %507 = arith.addf %503, %506 : vector<8x256xf32>
    %508 = math.rsqrt %507 : vector<8x256xf32>
    %509 = arith.mulf %505, %508 : vector<8x256xf32>
    %510 = vector.broadcast %458 : vector<1x256xf32> to vector<8x256xf32>
    %511 = arith.addf %509, %510 : vector<8x256xf32>
    %cst_111 = arith.constant 0.000000e+00 : f32
    %512 = vector.broadcast %cst_111 : f32 to vector<8x256xf32>
    %513 = arith.maximumf %511, %512 : vector<8x256xf32>
    %c1_i32_112 = arith.constant 1 : i32
    %c1_i32_113 = arith.constant 1 : i32
    %c1_i32_114 = arith.constant 1 : i32
    %c0_i32_115 = arith.constant 0 : i32
    %c0_i32_116 = arith.constant 0 : i32
    %514 = tpu.memref_slice %arg3[%c1_i32_112, %c0_i32_115, %c0_i32_116] : memref<3x256x128xbf16, #tpu.memory_space<any>> -> memref<1x256x128xbf16, #tpu.memory_space<any>>
    %515 = tpu.memref_squeeze %514 : memref<1x256x128xbf16, #tpu.memory_space<any>> -> memref<256x128xbf16, #tpu.memory_space<any>>
    %c0_i32_117 = arith.constant 0 : i32
    %c0_i32_118 = arith.constant 0 : i32
    %516 = tpu.memref_slice %arg6[%c1_i32_113, %c0_i32_117, %c0_i32_118] : memref<3x256x128xbf16, #tpu.memory_space<vmem>> -> memref<1x256x128xbf16, #tpu.memory_space<vmem>>
    %517 = tpu.memref_squeeze %516 : memref<1x256x128xbf16, #tpu.memory_space<vmem>> -> memref<256x128xbf16, #tpu.memory_space<vmem>>
    %518 = tpu.memref_slice %arg7[%c1_i32_114] : memref<3x!tpu.dma_semaphore, #tpu.memory_space<semaphore_mem>> -> memref<1x!tpu.dma_semaphore, #tpu.memory_space<semaphore_mem>>
    %519 = tpu.memref_squeeze %518 : memref<1x!tpu.dma_semaphore, #tpu.memory_space<semaphore_mem>> -> memref<!tpu.dma_semaphore, #tpu.memory_space<semaphore_mem>>
    tpu.wait_dma2 semaphore(%519 : memref<!tpu.dma_semaphore, #tpu.memory_space<semaphore_mem>>) src(%515 : memref<256x128xbf16, #tpu.memory_space<any>>) dst(%517 : memref<256x128xbf16, #tpu.memory_space<vmem>>)
    %520 = arith.truncf %513 : vector<8x256xf32> to vector<8x256xbf16>
    %c1_119 = arith.constant 1 : index
    %c0_120 = arith.constant 0 : index
    %c0_121 = arith.constant 0 : index
    %521 = vector.load %arg6[%c1_119, %c0_120, %c0_121] : memref<3x256x128xbf16, #tpu.memory_space<vmem>>, vector<1x256x128xbf16>
    %522 = vector.shape_cast %521 : vector<1x256x128xbf16> to vector<256x128xbf16>
    %cst_122 = arith.constant dense<0.000000e+00> : vector<8x128xf32>
    %523 = tpu.matmul %520, %522, %cst_122 {dimension_numbers = #tpu.dot_dimension_numbers<[1], [0], [0], [1], [0, 0, 1, 1], [], []>} : vector<8x256xbf16>, vector<256x128xbf16>, vector<8x128xf32> -> vector<8x128xf32>
    %524 = vector.broadcast %459 : vector<1x128xf32> to vector<8x128xf32>
    %525 = arith.addf %523, %524 : vector<8x128xf32>
    %526 = vector.extract_strided_slice %18 {offsets = [9, 0], sizes = [1, 256], strides = [1, 1]} : vector<16x256xf32> to vector<1x256xf32>
    %527 = vector.extract_strided_slice %18 {offsets = [10, 0], sizes = [1, 256], strides = [1, 1]} : vector<16x256xf32> to vector<1x256xf32>
    %528 = vector.extract_strided_slice %18 {offsets = [11, 0], sizes = [1, 256], strides = [1, 1]} : vector<16x256xf32> to vector<1x256xf32>
    %529 = vector.extract_strided_slice %18 {offsets = [12, 0], sizes = [1, 128], strides = [1, 1]} : vector<16x256xf32> to vector<1x128xf32>
    %530 = arith.truncf %385 : vector<8x128xf32> to vector<8x128xbf16>
    %c2 = arith.constant 2 : index
    %c0_123 = arith.constant 0 : index
    %c0_124 = arith.constant 0 : index
    %531 = vector.load %arg2[%c2, %c0_123, %c0_124] : memref<3x128x256xbf16, #tpu.memory_space<vmem>>, vector<1x128x256xbf16>
    %532 = vector.shape_cast %531 : vector<1x128x256xbf16> to vector<128x256xbf16>
    %cst_125 = arith.constant dense<0.000000e+00> : vector<8x256xf32>
    %533 = tpu.matmul %530, %532, %cst_125 {dimension_numbers = #tpu.dot_dimension_numbers<[1], [0], [0], [1], [0, 0, 1, 1], [], []>} : vector<8x128xbf16>, vector<128x256xbf16>, vector<8x256xf32> -> vector<8x256xf32>
    %534 = vector.broadcast %526 : vector<1x256xf32> to vector<8x256xf32>
    %535 = arith.addf %533, %534 : vector<8x256xf32>
    %cst_126 = arith.constant dense<0.000000e+00> : vector<256xf32>
    %536 = vector.multi_reduction <add>, %535, %cst_126 [0] : vector<8x256xf32> to vector<256xf32>
    %537 = vector.shape_cast %536 : vector<256xf32> to vector<1x256xf32>
    %538 = vector.broadcast %23 : vector<8x1xf32> to vector<8x256xf32>
    %539 = arith.mulf %535, %538 : vector<8x256xf32>
    %cst_127 = arith.constant dense<0.000000e+00> : vector<256xf32>
    %540 = vector.multi_reduction <add>, %539, %cst_127 [0] : vector<8x256xf32> to vector<256xf32>
    %541 = vector.shape_cast %540 : vector<256xf32> to vector<1x256xf32>
    %cst_128 = arith.constant 2.500000e-01 : f32
    %542 = vector.broadcast %cst_128 : f32 to vector<1x256xf32>
    %543 = arith.mulf %541, %542 : vector<1x256xf32>
    %544 = vector.broadcast %23 : vector<8x1xf32> to vector<8x256xf32>
    %545 = vector.broadcast %543 : vector<1x256xf32> to vector<8x256xf32>
    %546 = arith.mulf %544, %545 : vector<8x256xf32>
    %547 = arith.subf %537, %541 : vector<1x256xf32>
    %cst_129 = arith.constant 2.500000e-01 : f32
    %548 = vector.broadcast %cst_129 : f32 to vector<1x256xf32>
    %549 = arith.mulf %547, %548 : vector<1x256xf32>
    %550 = vector.broadcast %25 : vector<8x1xf32> to vector<8x256xf32>
    %551 = vector.broadcast %549 : vector<1x256xf32> to vector<8x256xf32>
    %552 = arith.mulf %550, %551 : vector<8x256xf32>
    %553 = arith.addf %546, %552 : vector<8x256xf32>
    %554 = arith.subf %535, %553 : vector<8x256xf32>
    %555 = arith.mulf %554, %554 : vector<8x256xf32>
    %cst_130 = arith.constant dense<0.000000e+00> : vector<256xf32>
    %556 = vector.multi_reduction <add>, %555, %cst_130 [0] : vector<8x256xf32> to vector<256xf32>
    %557 = vector.shape_cast %556 : vector<256xf32> to vector<1x256xf32>
    %558 = vector.broadcast %23 : vector<8x1xf32> to vector<8x256xf32>
    %559 = arith.mulf %555, %558 : vector<8x256xf32>
    %cst_131 = arith.constant dense<0.000000e+00> : vector<256xf32>
    %560 = vector.multi_reduction <add>, %559, %cst_131 [0] : vector<8x256xf32> to vector<256xf32>
    %561 = vector.shape_cast %560 : vector<256xf32> to vector<1x256xf32>
    %cst_132 = arith.constant 2.500000e-01 : f32
    %562 = vector.broadcast %cst_132 : f32 to vector<1x256xf32>
    %563 = arith.mulf %561, %562 : vector<1x256xf32>
    %564 = vector.broadcast %23 : vector<8x1xf32> to vector<8x256xf32>
    %565 = vector.broadcast %563 : vector<1x256xf32> to vector<8x256xf32>
    %566 = arith.mulf %564, %565 : vector<8x256xf32>
    %567 = arith.subf %557, %561 : vector<1x256xf32>
    %cst_133 = arith.constant 2.500000e-01 : f32
    %568 = vector.broadcast %cst_133 : f32 to vector<1x256xf32>
    %569 = arith.mulf %567, %568 : vector<1x256xf32>
    %570 = vector.broadcast %25 : vector<8x1xf32> to vector<8x256xf32>
    %571 = vector.broadcast %569 : vector<1x256xf32> to vector<8x256xf32>
    %572 = arith.mulf %570, %571 : vector<8x256xf32>
    %573 = arith.addf %566, %572 : vector<8x256xf32>
    %574 = vector.broadcast %527 : vector<1x256xf32> to vector<8x256xf32>
    %575 = arith.mulf %574, %554 : vector<8x256xf32>
    %cst_134 = arith.constant 9.99999974E-6 : f32
    %576 = vector.broadcast %cst_134 : f32 to vector<8x256xf32>
    %577 = arith.addf %573, %576 : vector<8x256xf32>
    %578 = math.rsqrt %577 : vector<8x256xf32>
    %579 = arith.mulf %575, %578 : vector<8x256xf32>
    %580 = vector.broadcast %528 : vector<1x256xf32> to vector<8x256xf32>
    %581 = arith.addf %579, %580 : vector<8x256xf32>
    %cst_135 = arith.constant 0.000000e+00 : f32
    %582 = vector.broadcast %cst_135 : f32 to vector<8x256xf32>
    %583 = arith.maximumf %581, %582 : vector<8x256xf32>
    %c2_i32_136 = arith.constant 2 : i32
    %c2_i32_137 = arith.constant 2 : i32
    %c2_i32_138 = arith.constant 2 : i32
    %c0_i32_139 = arith.constant 0 : i32
    %c0_i32_140 = arith.constant 0 : i32
    %584 = tpu.memref_slice %arg3[%c2_i32_136, %c0_i32_139, %c0_i32_140] : memref<3x256x128xbf16, #tpu.memory_space<any>> -> memref<1x256x128xbf16, #tpu.memory_space<any>>
    %585 = tpu.memref_squeeze %584 : memref<1x256x128xbf16, #tpu.memory_space<any>> -> memref<256x128xbf16, #tpu.memory_space<any>>
    %c0_i32_141 = arith.constant 0 : i32
    %c0_i32_142 = arith.constant 0 : i32
    %586 = tpu.memref_slice %arg6[%c2_i32_137, %c0_i32_141, %c0_i32_142] : memref<3x256x128xbf16, #tpu.memory_space<vmem>> -> memref<1x256x128xbf16, #tpu.memory_space<vmem>>
    %587 = tpu.memref_squeeze %586 : memref<1x256x128xbf16, #tpu.memory_space<vmem>> -> memref<256x128xbf16, #tpu.memory_space<vmem>>
    %588 = tpu.memref_slice %arg7[%c2_i32_138] : memref<3x!tpu.dma_semaphore, #tpu.memory_space<semaphore_mem>> -> memref<1x!tpu.dma_semaphore, #tpu.memory_space<semaphore_mem>>
    %589 = tpu.memref_squeeze %588 : memref<1x!tpu.dma_semaphore, #tpu.memory_space<semaphore_mem>> -> memref<!tpu.dma_semaphore, #tpu.memory_space<semaphore_mem>>
    tpu.wait_dma2 semaphore(%589 : memref<!tpu.dma_semaphore, #tpu.memory_space<semaphore_mem>>) src(%585 : memref<256x128xbf16, #tpu.memory_space<any>>) dst(%587 : memref<256x128xbf16, #tpu.memory_space<vmem>>)
    %590 = arith.truncf %583 : vector<8x256xf32> to vector<8x256xbf16>
    %c2_143 = arith.constant 2 : index
    %c0_144 = arith.constant 0 : index
    %c0_145 = arith.constant 0 : index
    %591 = vector.load %arg6[%c2_143, %c0_144, %c0_145] : memref<3x256x128xbf16, #tpu.memory_space<vmem>>, vector<1x256x128xbf16>
    %592 = vector.shape_cast %591 : vector<1x256x128xbf16> to vector<256x128xbf16>
    %cst_146 = arith.constant dense<0.000000e+00> : vector<8x128xf32>
    %593 = tpu.matmul %590, %592, %cst_146 {dimension_numbers = #tpu.dot_dimension_numbers<[1], [0], [0], [1], [0, 0, 1, 1], [], []>} : vector<8x256xbf16>, vector<256x128xbf16>, vector<8x128xf32> -> vector<8x128xf32>
    %594 = vector.broadcast %529 : vector<1x128xf32> to vector<8x128xf32>
    %595 = arith.addf %593, %594 : vector<8x128xf32>
    %596 = arith.mulf %525, %525 : vector<8x128xf32>
    %cst_147 = arith.constant dense<0.000000e+00> : vector<8xf32>
    %597 = vector.multi_reduction <add>, %596, %cst_147 [1] : vector<8x128xf32> to vector<8xf32>
    %598 = vector.shape_cast %597 : vector<8xf32> to vector<8x1xf32>
    %cst_148 = arith.constant 1.000000e-24 : f32
    %599 = vector.broadcast %cst_148 : f32 to vector<8x1xf32>
    %600 = arith.maximumf %598, %599 : vector<8x1xf32>
    %601 = math.rsqrt %600 : vector<8x1xf32>
    %602 = vector.broadcast %601 : vector<8x1xf32> to vector<8x128xf32>
    %603 = arith.mulf %525, %602 : vector<8x128xf32>
    %604 = arith.mulf %595, %595 : vector<8x128xf32>
    %cst_149 = arith.constant dense<0.000000e+00> : vector<8xf32>
    %605 = vector.multi_reduction <add>, %604, %cst_149 [1] : vector<8x128xf32> to vector<8xf32>
    %606 = vector.shape_cast %605 : vector<8xf32> to vector<8x1xf32>
    %cst_150 = arith.constant 1.000000e-24 : f32
    %607 = vector.broadcast %cst_150 : f32 to vector<8x1xf32>
    %608 = arith.maximumf %606, %607 : vector<8x1xf32>
    %609 = math.rsqrt %608 : vector<8x1xf32>
    %610 = vector.broadcast %609 : vector<8x1xf32> to vector<8x128xf32>
    %611 = arith.mulf %595, %610 : vector<8x128xf32>
    %c4_i32_151 = arith.constant 4 : i32
    %612 = tpu.dynamic_rotate %611 by %c4_i32_151 dim 0 : vector<8x128xf32>, i32 -> vector<8x128xf32>
    %613 = arith.mulf %603, %612 : vector<8x128xf32>
    %614 = vector.shape_cast %613 : vector<8x128xf32> to vector<1x8x128xf32>
    %cst_152 = arith.constant dense<0.000000e+00> : vector<1xf32>
    %615 = vector.multi_reduction <add>, %614, %cst_152 [1, 2] : vector<1x8x128xf32> to vector<1xf32>
    %616 = vector.shape_cast %615 : vector<1xf32> to vector<1x1x1xf32>
    %617 = vector.extract %616[0, 0, 0] : f32 from vector<1x1x1xf32>
    %cst_153 = arith.constant 0.000000e+00 : f32
    %618 = arith.subf %cst_153, %617 : f32
    %cst_154 = arith.constant 1.250000e-01 : f32
    %619 = arith.mulf %618, %cst_154 : f32
    %c0_155 = arith.constant 0 : index
    %c0_156 = arith.constant 0 : index
    %620 = memref.load %arg5[%c0_155, %c0_156] : memref<1x1xf32, #tpu.memory_space<smem>>
    memref.store %619, %arg5[%c0_155, %c0_156] : memref<1x1xf32, #tpu.memory_space<smem>>
    return
  }
}

</mosaic_0001>

<llo_original>
// kernel: point_byol_forward.1
$region0: #{point_byol_forward.1}
  #allocation0 [shape = 'u32[]', space=smem, size = 0x4, offset = 0x4, fixed_abs, tag = 'smem constant byte address 0x4 - core index']
  #allocation1 [shape = 'u32[144,128]{1,0:T(1,128)}', space=vmem, size = 0x12000, scoped, tag = 'internal scratch']
  #allocation2 [shape = 'bf16[3,256,128]{2,1,0:T(8,128)(2,1)}', space=vmem, size = 0x30000, scoped, tag = 'scratch operand']
  #allocation3 [shape = 's32[3]{0}', space=sflag, size = 0xc, scoped, tag = 'scratch operand']
  #allocation6 [shape = 's32[]', space=sflag, size = 0x4, offset = 0, fixed_abs, tag = 'sflag constant byte address 0x0 - dummy sync flag']
  #allocation7 [shape = 's32[]', space=sflag, size = 0x4, offset = 0, fixed_abs, tag = 'sflag constant byte address 0x0 - dummy sync flag']
  #allocation8 [shape = 'u32[]', space=smem, size = 0x4, offset = 0x44, fixed_abs, tag = 'smem constant byte address 0x44 - assertion arg 0']
  #allocation9 [shape = 'u32[]', space=smem, size = 0x4, offset = 0x48, fixed_abs, tag = 'smem constant byte address 0x48 - assertion arg 1']
  #allocation10 [shape = 's32[]', space=sflag, size = 0x4, offset = 0, fixed_abs, tag = 'sflag constant byte address 0x0 - dummy sync flag']
  #allocation11 [shape = 's32[]', space=sflag, size = 0x4, offset = 0, fixed_abs, tag = 'sflag constant byte address 0x0 - dummy sync flag']
  #allocation12 [shape = 's32[]', space=sflag, size = 0x4, offset = 0, fixed_abs, tag = 'sflag constant byte address 0x0 - dummy sync flag']
  #allocation13 [shape = 's32[]', space=sflag, size = 0x4, offset = 0, fixed_abs, tag = 'sflag constant byte address 0x0 - dummy sync flag']
  %s0 = inlined_call_operand.vmem [shape: f32[16,8,8], index: 0, kind: input, shape index: {}]
  %s1 = inlined_call_operand.vmem [shape: f32[8,256], index: 1, kind: input, shape index: {}]
  %s2 = inlined_call_operand.vmem [shape: bf16[3,128,256], index: 2, kind: input, shape index: {}]
  %s3 = inlined_call_operand.hbm [shape: bf16[3,256,128], index: 3, kind: input, shape index: {}]
  %s4 = inlined_call_operand.vmem [shape: f32[16,256], index: 4, kind: input, shape index: {}]
  %s5 = inlined_call_operand.hbm [shape: f32[1,1], index: 5, kind: output, shape index: {}]
  %s6 = sld [smem:[#allocation0]]
  $region38: #{point_byol_forward.1} parent=0
    _
  %s8 = ssub.s32 1, %s6
  %s9 = scalar_select 0, %s8, %s6
  $region1: #{point_byol_forward.1} parent=0
    #allocation4 [shape = 'u8[512]{0}', space=smem, size = 0x200, scoped, tag = 'output window, operand 0, single buffered']
    #allocation5 [shape = 's32[1]{0}', space=sflag, size = 0x4, scoped, tag = 'scoped memory for point_byol_forward.1']
    %10 = vsyncpa [#allocation5], 0
    // Predicated region
    $region2: #{point_byol_forward.1} parent=1 // pred_check
      _
    $region3: #{point_byol_forward.1} parent=1 // pred_check_branch
      %12 = sbr.rel (0) target = $region5
    $region4: #{point_byol_forward.1} parent=1 // pred_region
      _
    $region5: #{point_byol_forward.1} parent=1 // pred_fallthru
      _
    // Predicated region
    $region6: #{point_byol_forward.1} parent=1 // pred_check
      _
    $region7: #{point_byol_forward.1} parent=1 // pred_check_branch
      %14 = sbr.rel (0) target = $region9
    $region8: #{point_byol_forward.1} parent=1 // pred_region
      _
    $region9: #{point_byol_forward.1} parent=1 // pred_fallthru
      _
    // Predicated region
    $region10: #{point_byol_forward.1} parent=1 // pred_check
      _
    $region11: #{point_byol_forward.1} parent=1 // pred_check_branch
      %16 = sbr.rel (0) target = $region13
    $region12: #{point_byol_forward.1} parent=1 // pred_region
      _
    $region13: #{point_byol_forward.1} parent=1 // pred_fallthru
      _
    // Predicated region
    $region14: #{point_byol_forward.1} parent=1 // pred_check
      _
    $region15: #{point_byol_forward.1} parent=1 // pred_check_branch
      %18 = sbr.rel (0) target = $region17
    $region16: #{point_byol_forward.1} parent=1 // pred_region
      _
    $region17: #{point_byol_forward.1} parent=1 // pred_fallthru
      _
    // Predicated region
    $region18: #{point_byol_forward.1} parent=1 // pred_check
      _
    $region19: #{point_byol_forward.1} parent=1 // pred_check_branch
      %21 = sbr.rel target = $region21
    $region20: #{point_byol_forward.1} parent=1 // pred_region
      %22 = sst [smem:[#allocation8]] [#allocation7]
      %23 = sst [smem:[#allocation9]] [#allocation6]
    $region21: #{point_byol_forward.1} parent=1 // pred_fallthru
      _
    %25 = shalt.err (0)
    %s27 = sshll.u32 [#allocation2], 4
    %s28 = int_to_ptr.vmem [resolvable:$true] %s27
    %30 = dma.hbm_to_vmem [thread:$0]  %s3, 2048, %s28, [#allocation3]
    %s31 = scalar_lea.hbm %s3, 2048
    %s32 = scalar_lea.vmem [#allocation2], 128
    %s33 = scalar_lea.sflag [#allocation3], 1
    // Predicated region
    $region22: #{point_byol_forward.1} parent=1 // pred_check
      _
    $region23: #{point_byol_forward.1} parent=1 // pred_check_branch
      %35 = sbr.rel target = $region25
    $region24: #{point_byol_forward.1} parent=1 // pred_region
      %36 = sst [smem:[#allocation8]] [#allocation11]
      %37 = sst [smem:[#allocation9]] [#allocation10]
    $region25: #{point_byol_forward.1} parent=1 // pred_fallthru
      _
    %39 = shalt.err (0)
    %s41 = sshll.u32 %s32, 4
    %s42 = int_to_ptr.vmem [resolvable:$true] %s41
    %44 = dma.hbm_to_vmem [thread:$0]  %s31, 2048, %s42, %s33
    %s45 = scalar_lea.hbm %s3, 4096
    %s46 = scalar_lea.vmem [#allocation2], 256
    %s47 = scalar_lea.sflag [#allocation3], 2
    // Predicated region
    $region26: #{point_byol_forward.1} parent=1 // pred_check
      _
    $region27: #{point_byol_forward.1} parent=1 // pred_check_branch
      %49 = sbr.rel target = $region29
    $region28: #{point_byol_forward.1} parent=1 // pred_region
      %50 = sst [smem:[#allocation8]] [#allocation13]
      %51 = sst [smem:[#allocation9]] [#allocation12]
    $region29: #{point_byol_forward.1} parent=1 // pred_fallthru
      _
    %53 = shalt.err (0)
    %s55 = sshll.u32 %s46, 4
    %s56 = int_to_ptr.vmem [resolvable:$true] %s55
    %58 = dma.hbm_to_vmem [thread:$0]  %s45, 2048, %s56, %s47
    %v59 = vld [vmem:[%s4] sm:$0xff]
    %v60 = vld [vmem:[%s4 + $0x8] sm:$0xff]
    %v61 = vld [vmem:[%s4 + $0x10] sm:$0xff]
    %v62 = vld [vmem:[%s4 + $0x18] sm:$0xff]
    %v63 = vlaneseq
    %v64 = vshrl.u32 %v63, 7
    %vm65 = vcmp.lt.s32.totalorder %v64, 4
    %v66 = vsel %vm65, 1, 0
    %v67 = vcvt.s32.f32 %v66
    %v68 = vsub.f32 1.0, %v67
    %v69 = vld [vmem:[%s1] sm:$0xff]
    %v70 = vld [vmem:[%s1 + $0x8] sm:$0xff]
    %v71 = vld [vmem:[%s0] sm:$0xff]
    %73 = vset.pattern.permute.xlu0 0
    %74 = vperm.xlu0 %73, %v71
    %v75 = vpop.permute.xlu0 %74
    %v77 = vlaneseq
    %v78 = vshrl.u32 %v77, 7
    %v79 = vsub.s32 0, %v78
    %v80 = vrot.slane %v69, %v79
    %v81 = vlaneseq
    %v82 = vshrl.u32 %v81, 7
    %v83 = vsub.s32 0, %v82
    %v84 = vrot.slane %v70, %v83
    %v85 = vmul.f32 %v75, %v80
    %v86 = vmul.f32 %v75, %v84
    %87 = vset.pattern.permute.xlu0 1
    %88 = vperm.xlu0 %87, %v71
    %v89 = vpop.permute.xlu0 %88
    %v91 = vlaneseq
    %v92 = vshrl.u32 %v91, 7
    %v93 = vsub.s32 1, %v92
    %v94 = vrot.slane %v69, %v93
    %v95 = vlaneseq
    %v96 = vshrl.u32 %v95, 7
    %v97 = vsub.s32 1, %v96
    %v98 = vrot.slane %v70, %v97
    %v99 = vmul.f32 %v89, %v94
    %v100 = vmul.f32 %v89, %v98
    %v101 = vadd.f32 %v85, %v99
    %v102 = vadd.f32 %v86, %v100
    %103 = vset.pattern.permute.xlu0 2
    %104 = vperm.xlu0 %103, %v71
    %v105 = vpop.permute.xlu0 %104
    %v107 = vlaneseq
    %v108 = vshrl.u32 %v107, 7
    %v109 = vsub.s32 2, %v108
    %v110 = vrot.slane %v69, %v109
    %v111 = vlaneseq
    %v112 = vshrl.u32 %v111, 7
    %v113 = vsub.s32 2, %v112
    %v114 = vrot.slane %v70, %v113
    %v115 = vmul.f32 %v105, %v110
    %v116 = vmul.f32 %v105, %v114
    %v117 = vadd.f32 %v101, %v115
    %v118 = vadd.f32 %v102, %v116
    %v119 = vlaneseq
    %v120 = vshrl.u32 %v119, 7
    %v121 = vsub.s32 0, %v120
    %v122 = vrot.slane %v59, %v121
    %v123 = vlaneseq
    %v124 = vshrl.u32 %v123, 7
    %v125 = vsub.s32 0, %v124
    %v126 = vrot.slane %v60, %v125
    %v127 = vadd.f32 %v117, %v122
    %v128 = vadd.f32 %v118, %v126
    %v129 = vmax.f32 %v127, 0.0
    %v130 = vmax.f32 %v128, 0.0
    %v131 = vmax.f32 %v129, 0.0
    %v132 = vmax.f32 %v130, 0.0
    %s133 = scalar_lea.vmem %s0, 8
    %v134 = vld [vmem:[%s133] sm:$0xff]
    %136 = vset.pattern.permute.xlu0 0
    %137 = vperm.xlu0 %136, %v134
    %v138 = vpop.permute.xlu0 %137
    %v140 = vmul.f32 %v138, %v80
    %v141 = vmul.f32 %v138, %v84
    %142 = vset.pattern.permute.xlu0 1
    %143 = vperm.xlu0 %142, %v134
    %v144 = vpop.permute.xlu0 %143
    %v146 = vmul.f32 %v144, %v94
    %v147 = vmul.f32 %v144, %v98
    %v148 = vadd.f32 %v140, %v146
    %v149 = vadd.f32 %v141, %v147
    %150 = vset.pattern.permute.xlu0 2
    %151 = vperm.xlu0 %150, %v134
    %v152 = vpop.permute.xlu0 %151
    %v154 = vmul.f32 %v152, %v110
    %v155 = vmul.f32 %v152, %v114
    %v156 = vadd.f32 %v148, %v154
    %v157 = vadd.f32 %v149, %v155
    %v158 = vadd.f32 %v156, %v122
    %v159 = vadd.f32 %v157, %v126
    %v160 = vmax.f32 %v158, 0.0
    %v161 = vmax.f32 %v159, 0.0
    %v162 = vmax.f32 %v131, %v160
    %v163 = vmax.f32 %v132, %v161
    %s164 = scalar_lea.vmem %s0, 16
    %v165 = vld [vmem:[%s164] sm:$0xff]
    %167 = vset.pattern.permute.xlu0 0
    %168 = vperm.xlu0 %167, %v165
    %v169 = vpop.permute.xlu0 %168
    %v171 = vmul.f32 %v169, %v80
    %v172 = vmul.f32 %v169, %v84
    %173 = vset.pattern.permute.xlu0 1
    %174 = vperm.xlu0 %173, %v165
    %v175 = vpop.permute.xlu0 %174
    %v177 = vmul.f32 %v175, %v94
    %v178 = vmul.f32 %v175, %v98
    %v179 = vadd.f32 %v171, %v177
    %v180 = vadd.f32 %v172, %v178
    %181 = vset.pattern.permute.xlu0 2
    %182 = vperm.xlu0 %181, %v165
    %v183 = vpop.permute.xlu0 %182
    %v185 = vmul.f32 %v183, %v110
    %v186 = vmul.f32 %v183, %v114
    %v187 = vadd.f32 %v179, %v185
    %v188 = vadd.f32 %v180, %v186
    %v189 = vadd.f32 %v187, %v122
    %v190 = vadd.f32 %v188, %v126
    %v191 = vmax.f32 %v189, 0.0
    %v192 = vmax.f32 %v190, 0.0
    %v193 = vmax.f32 %v162, %v191
    %v194 = vmax.f32 %v163, %v192
    %s195 = scalar_lea.vmem %s0, 24
    %v196 = vld [vmem:[%s195] sm:$0xff]
    %198 = vset.pattern.permute.xlu0 0
    %199 = vperm.xlu0 %198, %v196
    %v200 = vpop.permute.xlu0 %199
    %v202 = vmul.f32 %v200, %v80
    %v203 = vmul.f32 %v200, %v84
    %204 = vset.pattern.permute.xlu0 1
    %205 = vperm.xlu0 %204, %v196
    %v206 = vpop.permute.xlu0 %205
    %v208 = vmul.f32 %v206, %v94
    %v209 = vmul.f32 %v206, %v98
    %v210 = vadd.f32 %v202, %v208
    %v211 = vadd.f32 %v203, %v209
    %212 = vset.pattern.permute.xlu0 2
    %213 = vperm.xlu0 %212, %v196
    %v214 = vpop.permute.xlu0 %213
    %v216 = vmul.f32 %v214, %v110
    %v217 = vmul.f32 %v214, %v114
    %v218 = vadd.f32 %v210, %v216
    %v219 = vadd.f32 %v211, %v217
    %v220 = vadd.f32 %v218, %v122
    %v221 = vadd.f32 %v219, %v126
    %v222 = vmax.f32 %v220, 0.0
    %v223 = vmax.f32 %v221, 0.0
    %v224 = vmax.f32 %v193, %v222
    %v225 = vmax.f32 %v194, %v223
    %s226 = scalar_lea.vmem %s0, 32
    %v227 = vld [vmem:[%s226] sm:$0xff]
    %229 = vset.pattern.permute.xlu0 0
    %230 = vperm.xlu0 %229, %v227
    %v231 = vpop.permute.xlu0 %230
    %v233 = vmul.f32 %v231, %v80
    %v234 = vmul.f32 %v231, %v84
    %235 = vset.pattern.permute.xlu0 1
    %236 = vperm.xlu0 %235, %v227
    %v237 = vpop.permute.xlu0 %236
    %v239 = vmul.f32 %v237, %v94
    %v240 = vmul.f32 %v237, %v98
    %v241 = vadd.f32 %v233, %v239
    %v242 = vadd.f32 %v234, %v240
    %243 = vset.pattern.permute.xlu0 2
    %244 = vperm.xlu0 %243, %v227
    %v245 = vpop.permute.xlu0 %244
    %v247 = vmul.f32 %v245, %v110
    %v248 = vmul.f32 %v245, %v114
    %v249 = vadd.f32 %v241, %v247
    %v250 = vadd.f32 %v242, %v248
    %v251 = vadd.f32 %v249, %v122
    %v252 = vadd.f32 %v250, %v126
    %v253 = vmax.f32 %v251, 0.0
    %v254 = vmax.f32 %v252, 0.0
    %v255 = vmax.f32 %v224, %v253
    %v256 = vmax.f32 %v225, %v254
    %s257 = scalar_lea.vmem %s0, 40
    %v258 = vld [vmem:[%s257] sm:$0xff]
    %260 = vset.pattern.permute.xlu0 0
    %261 = vperm.xlu0 %260, %v258
    %v262 = vpop.permute.xlu0 %261
    %v264 = vmul.f32 %v262, %v80
    %v265 = vmul.f32 %v262, %v84
    %266 = vset.pattern.permute.xlu0 1
    %267 = vperm.xlu0 %266, %v258
    %v268 = vpop.permute.xlu0 %267
    %v270 = vmul.f32 %v268, %v94
    %v271 = vmul.f32 %v268, %v98
    %v272 = vadd.f32 %v264, %v270
    %v273 = vadd.f32 %v265, %v271
    %274 = vset.pattern.permute.xlu0 2
    %275 = vperm.xlu0 %274, %v258
    %v276 = vpop.permute.xlu0 %275
    %v278 = vmul.f32 %v276, %v110
    %v279 = vmul.f32 %v276, %v114
    %v280 = vadd.f32 %v272, %v278
    %v281 = vadd.f32 %v273, %v279
    %v282 = vadd.f32 %v280, %v122
    %v283 = vadd.f32 %v281, %v126
    %v284 = vmax.f32 %v282, 0.0
    %v285 = vmax.f32 %v283, 0.0
    %v286 = vmax.f32 %v255, %v284
    %v287 = vmax.f32 %v256, %v285
    %s288 = scalar_lea.vmem %s0, 48
    %v289 = vld [vmem:[%s288] sm:$0xff]
    %291 = vset.pattern.permute.xlu0 0
    %292 = vperm.xlu0 %291, %v289
    %v293 = vpop.permute.xlu0 %292
    %v295 = vmul.f32 %v293, %v80
    %v296 = vmul.f32 %v293, %v84
    %297 = vset.pattern.permute.xlu0 1
    %298 = vperm.xlu0 %297, %v289
    %v299 = vpop.permute.xlu0 %298
    %v301 = vmul.f32 %v299, %v94
    %v302 = vmul.f32 %v299, %v98
    %v303 = vadd.f32 %v295, %v301
    %v304 = vadd.f32 %v296, %v302
    %305 = vset.pattern.permute.xlu0 2
    %306 = vperm.xlu0 %305, %v289
    %v307 = vpop.permute.xlu0 %306
    %v309 = vmul.f32 %v307, %v110
    %v310 = vmul.f32 %v307, %v114
    %v311 = vadd.f32 %v303, %v309
    %v312 = vadd.f32 %v304, %v310
    %v313 = vadd.f32 %v311, %v122
    %v314 = vadd.f32 %v312, %v126
    %v315 = vmax.f32 %v313, 0.0
    %v316 = vmax.f32 %v314, 0.0
    %v317 = vmax.f32 %v286, %v315
    %v318 = vmax.f32 %v287, %v316
    %s319 = scalar_lea.vmem %s0, 56
    %v320 = vld [vmem:[%s319] sm:$0xff]
    %322 = vset.pattern.permute.xlu0 0
    %323 = vperm.xlu0 %322, %v320
    %v324 = vpop.permute.xlu0 %323
    %v326 = vmul.f32 %v324, %v80
    %v327 = vmul.f32 %v324, %v84
    %328 = vset.pattern.permute.xlu0 1
    %329 = vperm.xlu0 %328, %v320
    %v330 = vpop.permute.xlu0 %329
    %v332 = vmul.f32 %v330, %v94
    %v333 = vmul.f32 %v330, %v98
    %v334 = vadd.f32 %v326, %v332
    %v335 = vadd.f32 %v327, %v333
    %336 = vset.pattern.permute.xlu0 2
    %337 = vperm.xlu0 %336, %v320
    %v338 = vpop.permute.xlu0 %337
    %v340 = vmul.f32 %v338, %v110
    %v341 = vmul.f32 %v338, %v114
    %v342 = vadd.f32 %v334, %v340
    %v343 = vadd.f32 %v335, %v341
    %v344 = vadd.f32 %v342, %v122
    %v345 = vadd.f32 %v343, %v126
    %v346 = vmax.f32 %v344, 0.0
    %v347 = vmax.f32 %v345, 0.0
    %v348 = vmax.f32 %v317, %v346
    %v349 = vmax.f32 %v318, %v347
    %s350 = scalar_lea.vmem %s0, 64
    %v351 = vld [vmem:[%s350] sm:$0xff]
    %353 = vset.pattern.permute.xlu0 0
    %354 = vperm.xlu0 %353, %v351
    %v355 = vpop.permute.xlu0 %354
    %v357 = vmul.f32 %v355, %v80
    %v358 = vmul.f32 %v355, %v84
    %359 = vset.pattern.permute.xlu0 1
    %360 = vperm.xlu0 %359, %v351
    %v361 = vpop.permute.xlu0 %360
    %v363 = vmul.f32 %v361, %v94
    %v364 = vmul.f32 %v361, %v98
    %v365 = vadd.f32 %v357, %v363
    %v366 = vadd.f32 %v358, %v364
    %367 = vset.pattern.permute.xlu0 2
    %368 = vperm.xlu0 %367, %v351
    %v369 = vpop.permute.xlu0 %368
    %v371 = vmul.f32 %v369, %v110
    %v372 = vmul.f32 %v369, %v114
    %v373 = vadd.f32 %v365, %v371
    %v374 = vadd.f32 %v366, %v372
    %v375 = vadd.f32 %v373, %v122
    %v376 = vadd.f32 %v374, %v126
    %v377 = vmax.f32 %v375, 0.0
    %v378 = vmax.f32 %v376, 0.0
    %v379 = vmax.f32 %v348, %v377
    %v380 = vmax.f32 %v349, %v378
    %s381 = scalar_lea.vmem %s0, 72
    %v382 = vld [vmem:[%s381] sm:$0xff]
    %384 = vset.pattern.permute.xlu0 0
    %385 = vperm.xlu0 %384, %v382
    %v386 = vpop.permute.xlu0 %385
    %v388 = vmul.f32 %v386, %v80
    %v389 = vmul.f32 %v386, %v84
    %390 = vset.pattern.permute.xlu0 1
    %391 = vperm.xlu0 %390, %v382
    %v392 = vpop.permute.xlu0 %391
    %v394 = vmul.f32 %v392, %v94
    %v395 = vmul.f32 %v392, %v98
    %v396 = vadd.f32 %v388, %v394
    %v397 = vadd.f32 %v389, %v395
    %398 = vset.pattern.permute.xlu0 2
    %399 = vperm.xlu0 %398, %v382
    %v400 = vpop.permute.xlu0 %399
    %v402 = vmul.f32 %v400, %v110
    %v403 = vmul.f32 %v400, %v114
    %v404 = vadd.f32 %v396, %v402
    %v405 = vadd.f32 %v397, %v403
    %v406 = vadd.f32 %v404, %v122
    %v407 = vadd.f32 %v405, %v126
    %v408 = vmax.f32 %v406, 0.0
    %v409 = vmax.f32 %v407, 0.0
    %v410 = vmax.f32 %v379, %v408
    %v411 = vmax.f32 %v380, %v409
    %s412 = scalar_lea.vmem %s0, 80
    %v413 = vld [vmem:[%s412] sm:$0xff]
    %415 = vset.pattern.permute.xlu0 0
    %416 = vperm.xlu0 %415, %v413
    %v417 = vpop.permute.xlu0 %416
    %v419 = vmul.f32 %v417, %v80
    %v420 = vmul.f32 %v417, %v84
    %421 = vset.pattern.permute.xlu0 1
    %422 = vperm.xlu0 %421, %v413
    %v423 = vpop.permute.xlu0 %422
    %v425 = vmul.f32 %v423, %v94
    %v426 = vmul.f32 %v423, %v98
    %v427 = vadd.f32 %v419, %v425
    %v428 = vadd.f32 %v420, %v426
    %429 = vset.pattern.permute.xlu0 2
    %430 = vperm.xlu0 %429, %v413
    %v431 = vpop.permute.xlu0 %430
    %v433 = vmul.f32 %v431, %v110
    %v434 = vmul.f32 %v431, %v114
    %v435 = vadd.f32 %v427, %v433
    %v436 = vadd.f32 %v428, %v434
    %v437 = vadd.f32 %v435, %v122
    %v438 = vadd.f32 %v436, %v126
    %v439 = vmax.f32 %v437, 0.0
    %v440 = vmax.f32 %v438, 0.0
    %v441 = vmax.f32 %v410, %v439
    %v442 = vmax.f32 %v411, %v440
    %s443 = scalar_lea.vmem %s0, 88
    %v444 = vld [vmem:[%s443] sm:$0xff]
    %446 = vset.pattern.permute.xlu0 0
    %447 = vperm.xlu0 %446, %v444
    %v448 = vpop.permute.xlu0 %447
    %v450 = vmul.f32 %v448, %v80
    %v451 = vmul.f32 %v448, %v84
    %452 = vset.pattern.permute.xlu0 1
    %453 = vperm.xlu0 %452, %v444
    %v454 = vpop.permute.xlu0 %453
    %v456 = vmul.f32 %v454, %v94
    %v457 = vmul.f32 %v454, %v98
    %v458 = vadd.f32 %v450, %v456
    %v459 = vadd.f32 %v451, %v457
    %460 = vset.pattern.permute.xlu0 2
    %461 = vperm.xlu0 %460, %v444
    %v462 = vpop.permute.xlu0 %461
    %v464 = vmul.f32 %v462, %v110
    %v465 = vmul.f32 %v462, %v114
    %v466 = vadd.f32 %v458, %v464
    %v467 = vadd.f32 %v459, %v465
    %v468 = vadd.f32 %v466, %v122
    %v469 = vadd.f32 %v467, %v126
    %v470 = vmax.f32 %v468, 0.0
    %v471 = vmax.f32 %v469, 0.0
    %v472 = vmax.f32 %v441, %v470
    %v473 = vmax.f32 %v442, %v471
    %s474 = scalar_lea.vmem %s0, 96
    %v475 = vld [vmem:[%s474] sm:$0xff]
    %477 = vset.pattern.permute.xlu0 0
    %478 = vperm.xlu0 %477, %v475
    %v479 = vpop.permute.xlu0 %478
    %v481 = vmul.f32 %v479, %v80
    %v482 = vmul.f32 %v479, %v84
    %483 = vset.pattern.permute.xlu0 1
    %484 = vperm.xlu0 %483, %v475
    %v485 = vpop.permute.xlu0 %484
    %v487 = vmul.f32 %v485, %v94
    %v488 = vmul.f32 %v485, %v98
    %v489 = vadd.f32 %v481, %v487
    %v490 = vadd.f32 %v482, %v488
    %491 = vset.pattern.permute.xlu0 2
    %492 = vperm.xlu0 %491, %v475
    %v493 = vpop.permute.xlu0 %492
    %v495 = vmul.f32 %v493, %v110
    %v496 = vmul.f32 %v493, %v114
    %v497 = vadd.f32 %v489, %v495
    %v498 = vadd.f32 %v490, %v496
    %v499 = vadd.f32 %v497, %v122
    %v500 = vadd.f32 %v498, %v126
    %v501 = vmax.f32 %v499, 0.0
    %v502 = vmax.f32 %v500, 0.0
    %v503 = vmax.f32 %v472, %v501
    %v504 = vmax.f32 %v473, %v502
    %s505 = scalar_lea.vmem %s0, 104
    %v506 = vld [vmem:[%s505] sm:$0xff]
    %508 = vset.pattern.permute.xlu0 0
    %509 = vperm.xlu0 %508, %v506
    %v510 = vpop.permute.xlu0 %509
    %v512 = vmul.f32 %v510, %v80
    %v513 = vmul.f32 %v510, %v84
    %514 = vset.pattern.permute.xlu0 1
    %515 = vperm.xlu0 %514, %v506
    %v516 = vpop.permute.xlu0 %515
    %v518 = vmul.f32 %v516, %v94
    %v519 = vmul.f32 %v516, %v98
    %v520 = vadd.f32 %v512, %v518
    %v521 = vadd.f32 %v513, %v519
    %522 = vset.pattern.permute.xlu0 2
    %523 = vperm.xlu0 %522, %v506
    %v524 = vpop.permute.xlu0 %523
    %v526 = vmul.f32 %v524, %v110
    %v527 = vmul.f32 %v524, %v114
    %v528 = vadd.f32 %v520, %v526
    %v529 = vadd.f32 %v521, %v527
    %v530 = vadd.f32 %v528, %v122
    %v531 = vadd.f32 %v529, %v126
    %v532 = vmax.f32 %v530, 0.0
    %v533 = vmax.f32 %v531, 0.0
    %v534 = vmax.f32 %v503, %v532
    %v535 = vmax.f32 %v504, %v533
    %s536 = scalar_lea.vmem %s0, 112
    %v537 = vld [vmem:[%s536] sm:$0xff]
    %539 = vset.pattern.permute.xlu0 0
    %540 = vperm.xlu0 %539, %v537
    %v541 = vpop.permute.xlu0 %540
    %v543 = vmul.f32 %v541, %v80
    %v544 = vmul.f32 %v541, %v84
    %545 = vset.pattern.permute.xlu0 1
    %546 = vperm.xlu0 %545, %v537
    %v547 = vpop.permute.xlu0 %546
    %v549 = vmul.f32 %v547, %v94
    %v550 = vmul.f32 %v547, %v98
    %v551 = vadd.f32 %v543, %v549
    %v552 = vadd.f32 %v544, %v550
    %553 = vset.pattern.permute.xlu0 2
    %554 = vperm.xlu0 %553, %v537
    %v555 = vpop.permute.xlu0 %554
    %v557 = vmul.f32 %v555, %v110
    %v558 = vmul.f32 %v555, %v114
    %v559 = vadd.f32 %v551, %v557
    %v560 = vadd.f32 %v552, %v558
    %v561 = vadd.f32 %v559, %v122
    %v562 = vadd.f32 %v560, %v126
    %v563 = vmax.f32 %v561, 0.0
    %v564 = vmax.f32 %v562, 0.0
    %v565 = vmax.f32 %v534, %v563
    %v566 = vmax.f32 %v535, %v564
    %s567 = scalar_lea.vmem %s0, 120
    %v568 = vld [vmem:[%s567] sm:$0xff]
    %570 = vset.pattern.permute.xlu0 0
    %571 = vperm.xlu0 %570, %v568
    %v572 = vpop.permute.xlu0 %571
    %v574 = vmul.f32 %v572, %v80
    %v575 = vmul.f32 %v572, %v84
    %576 = vset.pattern.permute.xlu0 1
    %577 = vperm.xlu0 %576, %v568
    %v578 = vpop.permute.xlu0 %577
    %v580 = vmul.f32 %v578, %v94
    %v581 = vmul.f32 %v578, %v98
    %v582 = vadd.f32 %v574, %v580
    %v583 = vadd.f32 %v575, %v581
    %584 = vset.pattern.permute.xlu0 2
    %585 = vperm.xlu0 %584, %v568
    %v586 = vpop.permute.xlu0 %585
    %v588 = vmul.f32 %v586, %v110
    %v589 = vmul.f32 %v586, %v114
    %v590 = vadd.f32 %v582, %v588
    %v591 = vadd.f32 %v583, %v589
    %v592 = vadd.f32 %v590, %v122
    %v593 = vadd.f32 %v591, %v126
    %v594 = vmax.f32 %v592, 0.0
    %v595 = vmax.f32 %v593, 0.0
    %v596 = vmax.f32 %v565, %v594
    %v597 = vmax.f32 %v566, %v595
    %v598 = vpack.c.bf16 %v596, %v596
    %v599 = vld [vmem:[%s2] sm:$0xff]
    %v600 = vld [vmem:[%s2 + $0x8] sm:$0xff]
    %v601 = vld [vmem:[%s2 + $0x10] sm:$0xff]
    %v602 = vld [vmem:[%s2 + $0x18] sm:$0xff]
    %v603 = vld [vmem:[%s2 + $0x20] sm:$0xff]
    %v604 = vld [vmem:[%s2 + $0x28] sm:$0xff]
    %v605 = vld [vmem:[%s2 + $0x30] sm:$0xff]
    %v606 = vld [vmem:[%s2 + $0x38] sm:$0xff]
    %v607 = vld [vmem:[%s2 + $0x40] sm:$0xff]
    %v608 = vld [vmem:[%s2 + $0x48] sm:$0xff]
    %v609 = vld [vmem:[%s2 + $0x50] sm:$0xff]
    %v610 = vld [vmem:[%s2 + $0x58] sm:$0xff]
    %v611 = vld [vmem:[%s2 + $0x60] sm:$0xff]
    %v612 = vld [vmem:[%s2 + $0x68] sm:$0xff]
    %v613 = vld [vmem:[%s2 + $0x70] sm:$0xff]
    %v614 = vld [vmem:[%s2 + $0x78] sm:$0xff]
    %v615 = vlaneseq
    %v616 = vshrl.u32 %v615, 7
    %v617 = vsub.s32 1, %v616
    %v618 = vrot.slane %v59, %v617
    %v619 = vlaneseq
    %v620 = vshrl.u32 %v619, 7
    %v621 = vsub.s32 1, %v620
    %v622 = vrot.slane %v60, %v621
    %v639 = vunpack.c.l.b16 %v599
    %v640 = vunpack.c.h.b16 %v599
    %v641 = vunpack.c.l.b16 %v600
    %v642 = vunpack.c.h.b16 %v600
    %v643 = vunpack.c.l.b16 %v601
    %v644 = vunpack.c.h.b16 %v601
    %v645 = vunpack.c.l.b16 %v602
    %v646 = vunpack.c.h.b16 %v602
    %v647 = vunpack.c.l.b16 %v603
    %v648 = vunpack.c.h.b16 %v603
    %v649 = vunpack.c.l.b16 %v604
    %v650 = vunpack.c.h.b16 %v604
    %v651 = vunpack.c.l.b16 %v605
    %v652 = vunpack.c.h.b16 %v605
    %v653 = vunpack.c.l.b16 %v606
    %v654 = vunpack.c.h.b16 %v606
    %v655 = vunpack.c.l.b16 %v607
    %v656 = vunpack.c.h.b16 %v607
    %v657 = vunpack.c.l.b16 %v608
    %v658 = vunpack.c.h.b16 %v608
    %v659 = vunpack.c.l.b16 %v609
    %v660 = vunpack.c.h.b16 %v609
    %v661 = vunpack.c.l.b16 %v610
    %v662 = vunpack.c.h.b16 %v610
    %v663 = vunpack.c.l.b16 %v611
    %v664 = vunpack.c.h.b16 %v611
    %v665 = vunpack.c.l.b16 %v612
    %v666 = vunpack.c.h.b16 %v612
    %v667 = vunpack.c.l.b16 %v613
    %v668 = vunpack.c.h.b16 %v613
    %v669 = vunpack.c.l.b16 %v614
    %v670 = vunpack.c.h.b16 %v614
    %v671 = vpack.c.b16 %v641, %v639
    %v672 = vpack.c.b16 %v642, %v640
    %v673 = vpack.c.b16 %v645, %v643
    %v674 = vpack.c.b16 %v646, %v644
    %v675 = vpack.c.b16 %v649, %v647
    %v676 = vpack.c.b16 %v650, %v648
    %v677 = vpack.c.b16 %v653, %v651
    %v678 = vpack.c.b16 %v654, %v652
    %v679 = vpack.c.b16 %v657, %v655
    %v680 = vpack.c.b16 %v658, %v656
    %v681 = vpack.c.b16 %v661, %v659
    %v682 = vpack.c.b16 %v662, %v660
    %v683 = vpack.c.b16 %v665, %v663
    %v684 = vpack.c.b16 %v666, %v664
    %v685 = vpack.c.b16 %v669, %v667
    %v686 = vpack.c.b16 %v670, %v668
    %703 = vmatprep.subr.bf16.mxu0 %v686
    %704 = vmatpush1.bf16.msra.mxu0 %v685
    %705 = vmatprep.subr.bf16.mxu0 %v684
    %706 = vmatpush1.bf16.msra.mxu0 %v683
    %707 = vmatprep.subr.bf16.mxu0 %v682
    %708 = vmatpush1.bf16.msra.mxu0 %v681
    %709 = vmatprep.subr.bf16.mxu0 %v680
    %710 = vmatpush1.bf16.msra.mxu0 %v679
    %711 = vmatprep.subr.bf16.mxu0 %v678
    %712 = vmatpush1.bf16.msra.mxu0 %v677
    %713 = vmatprep.subr.bf16.mxu0 %v676
    %714 = vmatpush1.bf16.msra.mxu0 %v675
    %715 = vmatprep.subr.bf16.mxu0 %v674
    %716 = vmatpush1.bf16.msra.mxu0 %v673
    %717 = vmatprep.subr.bf16.mxu0 %v672
    %718 = vmatpush1.bf16.msra.mxu0 %v671
    %719 = vmatprep.subr.bf16.mxu0 0
    %720 = vmatpush2.bf16.msra.mxu0 0
    %721 = vmatprep.subr.bf16.mxu0 0
    %722 = vmatpush2.bf16.msra.mxu0 0
    %723 = vmatprep.subr.bf16.mxu0 0
    %724 = vmatpush2.bf16.msra.mxu0 0
    %725 = vmatprep.subr.bf16.mxu0 0
    %726 = vmatpush2.bf16.msra.mxu0 0
    %727 = vmatprep.subr.bf16.mxu0 0
    %728 = vmatpush2.bf16.msra.mxu0 0
    %729 = vmatprep.subr.bf16.mxu0 0
    %730 = vmatpush2.bf16.msra.mxu0 0
    %731 = vmatprep.subr.bf16.mxu0 0
    %732 = vmatpush2.bf16.msra.mxu0 0
    %733 = vmatprep.subr.bf16.mxu0 0
    %734 = vmatpush2.bf16.msra.mxu0 0
    %735 = vmatprep.mubr.bf16.mxu0 0
    %736 = vmatmul.mubr.bf16.gmra.mxu0 %v598
    %v737 = vpop.f32.mrf.mxu0
    %v738 = vadd.f32 %v618, %v737
    %v739 = vpop.f32.mrf.mxu0
    %v740 = vadd.f32 %v622, %v739
    %v741 = vpop.f32.mrf.mxu0
    %v742 = vpop.f32.mrf.mxu0
    %743 = vdwg.mxu0
    %v744 = vrot.slane %v738, 4
    %v745 = vadd.f32 %v738, %v744
    %v746 = vrot.slane %v745, 2
    %v747 = vadd.f32 %v745, %v746
    %v748 = vrot.slane %v747, 1
    %v749 = vadd.f32 %v747, %v748
    %v750 = vrot.slane %v740, 4
    %v751 = vadd.f32 %v740, %v750
    %v752 = vrot.slane %v751, 2
    %v753 = vadd.f32 %v751, %v752
    %v754 = vrot.slane %v753, 1
    %v755 = vadd.f32 %v753, %v754
    %v756 = vmul.f32 %v738, %v67
    %v757 = vmul.f32 %v740, %v67
    %v758 = vrot.slane %v756, 4
    %v759 = vadd.f32 %v756, %v758
    %v760 = vrot.slane %v759, 2
    %v761 = vadd.f32 %v759, %v760
    %v762 = vrot.slane %v761, 1
    %v763 = vadd.f32 %v761, %v762
    %v764 = vrot.slane %v757, 4
    %v765 = vadd.f32 %v757, %v764
    %v766 = vrot.slane %v765, 2
    %v767 = vadd.f32 %v765, %v766
    %v768 = vrot.slane %v767, 1
    %v769 = vadd.f32 %v767, %v768
    %v770 = vmul.f32 %v763, 0.25
    %v771 = vmul.f32 %v769, 0.25
    %v772 = vmul.f32 %v67, %v770
    %v773 = vmul.f32 %v67, %v771
    %v774 = vsub.f32 %v749, %v763
    %v775 = vsub.f32 %v755, %v769
    %v776 = vmul.f32 %v774, 0.25
    %v777 = vmul.f32 %v775, 0.25
    %v778 = vmul.f32 %v68, %v776
    %v779 = vmul.f32 %v68, %v777
    %v780 = vadd.f32 %v772, %v778
    %v781 = vadd.f32 %v773, %v779
    %v782 = vsub.f32 %v738, %v780
    %v783 = vsub.f32 %v740, %v781
    %v784 = vmul.f32 %v782, %v782
    %v785 = vmul.f32 %v783, %v783
    %v786 = vrot.slane %v784, 4
    %v787 = vadd.f32 %v784, %v786
    %v788 = vrot.slane %v787, 2
    %v789 = vadd.f32 %v787, %v788
    %v790 = vrot.slane %v789, 1
    %v791 = vadd.f32 %v789, %v790
    %v792 = vrot.slane %v785, 4
    %v793 = vadd.f32 %v785, %v792
    %v794 = vrot.slane %v793, 2
    %v795 = vadd.f32 %v793, %v794
    %v796 = vrot.slane %v795, 1
    %v797 = vadd.f32 %v795, %v796
    %v798 = vmul.f32 %v784, %v67
    %v799 = vmul.f32 %v785, %v67
    %v800 = vrot.slane %v798, 4
    %v801 = vadd.f32 %v798, %v800
    %v802 = vrot.slane %v801, 2
    %v803 = vadd.f32 %v801, %v802
    %v804 = vrot.slane %v803, 1
    %v805 = vadd.f32 %v803, %v804
    %v806 = vrot.slane %v799, 4
    %v807 = vadd.f32 %v799, %v806
    %v808 = vrot.slane %v807, 2
    %v809 = vadd.f32 %v807, %v808
    %v810 = vrot.slane %v809, 1
    %v811 = vadd.f32 %v809, %v810
    %v812 = vmul.f32 %v805, 0.25
    %v813 = vmul.f32 %v811, 0.25
    %v814 = vmul.f32 %v67, %v812
    %v815 = vmul.f32 %v67, %v813
    %v816 = vsub.f32 %v791, %v805
    %v817 = vsub.f32 %v797, %v811
    %v818 = vmul.f32 %v816, 0.25
    %v819 = vmul.f32 %v817, 0.25
    %v820 = vmul.f32 %v68, %v818
    %v821 = vmul.f32 %v68, %v819
    %v822 = vadd.f32 %v814, %v820
    %v823 = vadd.f32 %v815, %v821
    %v824 = vlaneseq
    %v825 = vshrl.u32 %v824, 7
    %v826 = vsub.s32 2, %v825
    %v827 = vrot.slane %v59, %v826
    %v828 = vlaneseq
    %v829 = vshrl.u32 %v828, 7
    %v830 = vsub.s32 2, %v829
    %v831 = vrot.slane %v60, %v830
    %v832 = vmul.f32 %v827, %v782
    %v833 = vmul.f32 %v831, %v783
    %v834 = vadd.f32 %v822, 1e-05
    %v835 = vadd.f32 %v823, 1e-05
    %v836 = vrsqrt.pop %v834
    %v837 = vrsqrt.pop %v835
    %v838 = vmul.f32 %v832, %v836
    %v839 = vmul.f32 %v833, %v837
    %v840 = vlaneseq
    %v841 = vshrl.u32 %v840, 7
    %v842 = vsub.s32 3, %v841
    %v843 = vrot.slane %v59, %v842
    %v844 = vlaneseq
    %v845 = vshrl.u32 %v844, 7
    %v846 = vsub.s32 3, %v845
    %v847 = vrot.slane %v60, %v846
    %v848 = vadd.f32 %v838, %v843
    %v849 = vadd.f32 %v839, %v847
    %v850 = vmax.f32 %v848, 0.0
    %v851 = vmax.f32 %v849, 0.0
    %s852 = smul.u32 4, 32
    %s853 = smul.u32 %s852, 1
    %s854 = sshll.u32 %s853, 4
    %855 = dma.done [#allocation3], %s854
    %v856 = vpack.c.bf16 %v850, %v850
    %v857 = vpack.c.bf16 %v851, %v851
    %v858 = vld [vmem:[#allocation2] sm:$0xf]
    %v859 = vld [vmem:[#allocation2 + $0x4] sm:$0xf]
    %v860 = vld [vmem:[#allocation2 + $0x8] sm:$0xf]
    %v861 = vld [vmem:[#allocation2 + $0xc] sm:$0xf]
    %v862 = vld [vmem:[#allocation2 + $0x10] sm:$0xf]
    %v863 = vld [vmem:[#allocation2 + $0x14] sm:$0xf]
    %v864 = vld [vmem:[#allocation2 + $0x18] sm:$0xf]
    %v865 = vld [vmem:[#allocation2 + $0x1c] sm:$0xf]
    %v866 = vld [vmem:[#allocation2 + $0x20] sm:$0xf]
    %v867 = vld [vmem:[#allocation2 + $0x24] sm:$0xf]
    %v868 = vld [vmem:[#allocation2 + $0x28] sm:$0xf]
    %v869 = vld [vmem:[#allocation2 + $0x2c] sm:$0xf]
    %v870 = vld [vmem:[#allocation2 + $0x30] sm:$0xf]
    %v871 = vld [vmem:[#allocation2 + $0x34] sm:$0xf]
    %v872 = vld [vmem:[#allocation2 + $0x38] sm:$0xf]
    %v873 = vld [vmem:[#allocation2 + $0x3c] sm:$0xf]
    %v874 = vld [vmem:[#allocation2 + $0x40] sm:$0xf]
    %v875 = vld [vmem:[#allocation2 + $0x44] sm:$0xf]
    %v876 = vld [vmem:[#allocation2 + $0x48] sm:$0xf]
    %v877 = vld [vmem:[#allocation2 + $0x4c] sm:$0xf]
    %v878 = vld [vmem:[#allocation2 + $0x50] sm:$0xf]
    %v879 = vld [vmem:[#allocation2 + $0x54] sm:$0xf]
    %v880 = vld [vmem:[#allocation2 + $0x58] sm:$0xf]
    %v881 = vld [vmem:[#allocation2 + $0x5c] sm:$0xf]
    %v882 = vld [vmem:[#allocation2 + $0x60] sm:$0xf]
    %v883 = vld [vmem:[#allocation2 + $0x64] sm:$0xf]
    %v884 = vld [vmem:[#allocation2 + $0x68] sm:$0xf]
    %v885 = vld [vmem:[#allocation2 + $0x6c] sm:$0xf]
    %v886 = vld [vmem:[#allocation2 + $0x70] sm:$0xf]
    %v887 = vld [vmem:[#allocation2 + $0x74] sm:$0xf]
    %v888 = vld [vmem:[#allocation2 + $0x78] sm:$0xf]
    %v889 = vld [vmem:[#allocation2 + $0x7c] sm:$0xf]
    %v890 = vlaneseq
    %v891 = vshrl.u32 %v890, 7
    %v892 = vsub.s32 4, %v891
    %v893 = vrot.slane %v59, %v892
    %v926 = vunpack.c.l.b16 %v858
    %v927 = vunpack.c.l.b16 %v859
    %v928 = vunpack.c.l.b16 %v860
    %v929 = vunpack.c.l.b16 %v861
    %v930 = vunpack.c.l.b16 %v862
    %v931 = vunpack.c.l.b16 %v863
    %v932 = vunpack.c.l.b16 %v864
    %v933 = vunpack.c.l.b16 %v865
    %v934 = vunpack.c.l.b16 %v866
    %v935 = vunpack.c.l.b16 %v867
    %v936 = vunpack.c.l.b16 %v868
    %v937 = vunpack.c.l.b16 %v869
    %v938 = vunpack.c.l.b16 %v870
    %v939 = vunpack.c.l.b16 %v871
    %v940 = vunpack.c.l.b16 %v872
    %v941 = vunpack.c.l.b16 %v873
    %v942 = vunpack.c.l.b16 %v874
    %v943 = vunpack.c.l.b16 %v875
    %v944 = vunpack.c.l.b16 %v876
    %v945 = vunpack.c.l.b16 %v877
    %v946 = vunpack.c.l.b16 %v878
    %v947 = vunpack.c.l.b16 %v879
    %v948 = vunpack.c.l.b16 %v880
    %v949 = vunpack.c.l.b16 %v881
    %v950 = vunpack.c.l.b16 %v882
    %v951 = vunpack.c.l.b16 %v883
    %v952 = vunpack.c.l.b16 %v884
    %v953 = vunpack.c.l.b16 %v885
    %v954 = vunpack.c.l.b16 %v886
    %v955 = vunpack.c.l.b16 %v887
    %v956 = vunpack.c.l.b16 %v888
    %v957 = vunpack.c.l.b16 %v889
    %v958 = vpack.c.b16 %v927, %v926
    %v959 = vpack.c.b16 %v929, %v928
    %v960 = vpack.c.b16 %v931, %v930
    %v961 = vpack.c.b16 %v933, %v932
    %v962 = vpack.c.b16 %v935, %v934
    %v963 = vpack.c.b16 %v937, %v936
    %v964 = vpack.c.b16 %v939, %v938
    %v965 = vpack.c.b16 %v941, %v940
    %v966 = vpack.c.b16 %v943, %v942
    %v967 = vpack.c.b16 %v945, %v944
    %v968 = vpack.c.b16 %v947, %v946
    %v969 = vpack.c.b16 %v949, %v948
    %v970 = vpack.c.b16 %v951, %v950
    %v971 = vpack.c.b16 %v953, %v952
    %v972 = vpack.c.b16 %v955, %v954
    %v973 = vpack.c.b16 %v957, %v956
    %990 = vmatprep.subr.bf16.mxu0 0
    %991 = vmatpush1.bf16.msra.mxu0 %v965
    %992 = vmatprep.subr.bf16.mxu0 0
    %993 = vmatpush1.bf16.msra.mxu0 %v964
    %994 = vmatprep.subr.bf16.mxu0 0
    %995 = vmatpush1.bf16.msra.mxu0 %v963
    %996 = vmatprep.subr.bf16.mxu0 0
    %997 = vmatpush1.bf16.msra.mxu0 %v962
    %998 = vmatprep.subr.bf16.mxu0 0
    %999 = vmatpush1.bf16.msra.mxu0 %v961
    %1000 = vmatprep.subr.bf16.mxu0 0
    %1001 = vmatpush1.bf16.msra.mxu0 %v960
    %1002 = vmatprep.subr.bf16.mxu0 0
    %1003 = vmatpush1.bf16.msra.mxu0 %v959
    %1004 = vmatprep.subr.bf16.mxu0 0
    %1005 = vmatpush1.bf16.msra.mxu0 %v958
    %1006 = vmatprep.subr.bf16.mxu0 0
    %1007 = vmatpush2.bf16.msra.mxu0 %v973
    %1008 = vmatprep.subr.bf16.mxu0 0
    %1009 = vmatpush2.bf16.msra.mxu0 %v972
    %1010 = vmatprep.subr.bf16.mxu0 0
    %1011 = vmatpush2.bf16.msra.mxu0 %v971
    %1012 = vmatprep.subr.bf16.mxu0 0
    %1013 = vmatpush2.bf16.msra.mxu0 %v970
    %1014 = vmatprep.subr.bf16.mxu0 0
    %1015 = vmatpush2.bf16.msra.mxu0 %v969
    %1016 = vmatprep.subr.bf16.mxu0 0
    %1017 = vmatpush2.bf16.msra.mxu0 %v968
    %1018 = vmatprep.subr.bf16.mxu0 0
    %1019 = vmatpush2.bf16.msra.mxu0 %v967
    %1020 = vmatprep.subr.bf16.mxu0 0
    %1021 = vmatpush2.bf16.msra.mxu0 %v966
    %1022 = vmatprep.mubr.bf16.mxu0 %v857
    %1023 = vmatmul.mubr.bf16.gmra.mxu0 %v856
    %v1024 = vpop.f32.mrf.mxu0
    %v1025 = vadd.f32 %v893, %v1024
    %v1026 = vpop.f32.mrf.mxu0
    %v1027 = vpop.f32.mrf.mxu0
    %v1028 = vpop.f32.mrf.mxu0
    %1029 = vdwg.mxu0
    %v1030 = vpack.c.bf16 %v1025, %v1025
    %s1031 = scalar_lea.vmem %s2, 128
    %v1032 = vld [vmem:[%s1031] sm:$0xff]
    %v1033 = vld [vmem:[%s1031 + $0x8] sm:$0xff]
    %v1034 = vld [vmem:[%s1031 + $0x10] sm:$0xff]
    %v1035 = vld [vmem:[%s1031 + $0x18] sm:$0xff]
    %v1036 = vld [vmem:[%s1031 + $0x20] sm:$0xff]
    %v1037 = vld [vmem:[%s1031 + $0x28] sm:$0xff]
    %v1038 = vld [vmem:[%s1031 + $0x30] sm:$0xff]
    %v1039 = vld [vmem:[%s1031 + $0x38] sm:$0xff]
    %v1040 = vld [vmem:[%s1031 + $0x40] sm:$0xff]
    %v1041 = vld [vmem:[%s1031 + $0x48] sm:$0xff]
    %v1042 = vld [vmem:[%s1031 + $0x50] sm:$0xff]
    %v1043 = vld [vmem:[%s1031 + $0x58] sm:$0xff]
    %v1044 = vld [vmem:[%s1031 + $0x60] sm:$0xff]
    %v1045 = vld [vmem:[%s1031 + $0x68] sm:$0xff]
    %v1046 = vld [vmem:[%s1031 + $0x70] sm:$0xff]
    %v1047 = vld [vmem:[%s1031 + $0x78] sm:$0xff]
    %v1048 = vlaneseq
    %v1049 = vshrl.u32 %v1048, 7
    %v1050 = vsub.s32 5, %v1049
    %v1051 = vrot.slane %v59, %v1050
    %v1052 = vlaneseq
    %v1053 = vshrl.u32 %v1052, 7
    %v1054 = vsub.s32 5, %v1053
    %v1055 = vrot.slane %v60, %v1054
    %v1072 = vunpack.c.l.b16 %v1032
    %v1073 = vunpack.c.h.b16 %v1032
    %v1074 = vunpack.c.l.b16 %v1033
    %v1075 = vunpack.c.h.b16 %v1033
    %v1076 = vunpack.c.l.b16 %v1034
    %v1077 = vunpack.c.h.b16 %v1034
    %v1078 = vunpack.c.l.b16 %v1035
    %v1079 = vunpack.c.h.b16 %v1035
    %v1080 = vunpack.c.l.b16 %v1036
    %v1081 = vunpack.c.h.b16 %v1036
    %v1082 = vunpack.c.l.b16 %v1037
    %v1083 = vunpack.c.h.b16 %v1037
    %v1084 = vunpack.c.l.b16 %v1038
    %v1085 = vunpack.c.h.b16 %v1038
    %v1086 = vunpack.c.l.b16 %v1039
    %v1087 = vunpack.c.h.b16 %v1039
    %v1088 = vunpack.c.l.b16 %v1040
    %v1089 = vunpack.c.h.b16 %v1040
    %v1090 = vunpack.c.l.b16 %v1041
    %v1091 = vunpack.c.h.b16 %v1041
    %v1092 = vunpack.c.l.b16 %v1042
    %v1093 = vunpack.c.h.b16 %v1042
    %v1094 = vunpack.c.l.b16 %v1043
    %v1095 = vunpack.c.h.b16 %v1043
    %v1096 = vunpack.c.l.b16 %v1044
    %v1097 = vunpack.c.h.b16 %v1044
    %v1098 = vunpack.c.l.b16 %v1045
    %v1099 = vunpack.c.h.b16 %v1045
    %v1100 = vunpack.c.l.b16 %v1046
    %v1101 = vunpack.c.h.b16 %v1046
    %v1102 = vunpack.c.l.b16 %v1047
    %v1103 = vunpack.c.h.b16 %v1047
    %v1104 = vpack.c.b16 %v1074, %v1072
    %v1105 = vpack.c.b16 %v1075, %v1073
    %v1106 = vpack.c.b16 %v1078, %v1076
    %v1107 = vpack.c.b16 %v1079, %v1077
    %v1108 = vpack.c.b16 %v1082, %v1080
    %v1109 = vpack.c.b16 %v1083, %v1081
    %v1110 = vpack.c.b16 %v1086, %v1084
    %v1111 = vpack.c.b16 %v1087, %v1085
    %v1112 = vpack.c.b16 %v1090, %v1088
    %v1113 = vpack.c.b16 %v1091, %v1089
    %v1114 = vpack.c.b16 %v1094, %v1092
    %v1115 = vpack.c.b16 %v1095, %v1093
    %v1116 = vpack.c.b16 %v1098, %v1096
    %v1117 = vpack.c.b16 %v1099, %v1097
    %v1118 = vpack.c.b16 %v1102, %v1100
    %v1119 = vpack.c.b16 %v1103, %v1101
    %1136 = vmatprep.subr.bf16.mxu0 %v1119
    %1137 = vmatpush1.bf16.msra.mxu0 %v1118
    %1138 = vmatprep.subr.bf16.mxu0 %v1117
    %1139 = vmatpush1.bf16.msra.mxu0 %v1116
    %1140 = vmatprep.subr.bf16.mxu0 %v1115
    %1141 = vmatpush1.bf16.msra.mxu0 %v1114
    %1142 = vmatprep.subr.bf16.mxu0 %v1113
    %1143 = vmatpush1.bf16.msra.mxu0 %v1112
    %1144 = vmatprep.subr.bf16.mxu0 %v1111
    %1145 = vmatpush1.bf16.msra.mxu0 %v1110
    %1146 = vmatprep.subr.bf16.mxu0 %v1109
    %1147 = vmatpush1.bf16.msra.mxu0 %v1108
    %1148 = vmatprep.subr.bf16.mxu0 %v1107
    %1149 = vmatpush1.bf16.msra.mxu0 %v1106
    %1150 = vmatprep.subr.bf16.mxu0 %v1105
    %1151 = vmatpush1.bf16.msra.mxu0 %v1104
    %1152 = vmatprep.subr.bf16.mxu0 0
    %1153 = vmatpush2.bf16.msra.mxu0 0
    %1154 = vmatprep.subr.bf16.mxu0 0
    %1155 = vmatpush2.bf16.msra.mxu0 0
    %1156 = vmatprep.subr.bf16.mxu0 0
    %1157 = vmatpush2.bf16.msra.mxu0 0
    %1158 = vmatprep.subr.bf16.mxu0 0
    %1159 = vmatpush2.bf16.msra.mxu0 0
    %1160 = vmatprep.subr.bf16.mxu0 0
    %1161 = vmatpush2.bf16.msra.mxu0 0
    %1162 = vmatprep.subr.bf16.mxu0 0
    %1163 = vmatpush2.bf16.msra.mxu0 0
    %1164 = vmatprep.subr.bf16.mxu0 0
    %1165 = vmatpush2.bf16.msra.mxu0 0
    %1166 = vmatprep.subr.bf16.mxu0 0
    %1167 = vmatpush2.bf16.msra.mxu0 0
    %1168 = vmatprep.mubr.bf16.mxu0 0
    %1169 = vmatmul.mubr.bf16.gmra.mxu0 %v1030
    %v1170 = vpop.f32.mrf.mxu0
    %v1171 = vadd.f32 %v1051, %v1170
    %v1172 = vpop.f32.mrf.mxu0
    %v1173 = vadd.f32 %v1055, %v1172
    %v1174 = vpop.f32.mrf.mxu0
    %v1175 = vpop.f32.mrf.mxu0
    %1176 = vdwg.mxu0
    %v1177 = vrot.slane %v1171, 4
    %v1178 = vadd.f32 %v1171, %v1177
    %v1179 = vrot.slane %v1178, 2
    %v1180 = vadd.f32 %v1178, %v1179
    %v1181 = vrot.slane %v1180, 1
    %v1182 = vadd.f32 %v1180, %v1181
    %v1183 = vrot.slane %v1173, 4
    %v1184 = vadd.f32 %v1173, %v1183
    %v1185 = vrot.slane %v1184, 2
    %v1186 = vadd.f32 %v1184, %v1185
    %v1187 = vrot.slane %v1186, 1
    %v1188 = vadd.f32 %v1186, %v1187
    %v1189 = vmul.f32 %v1171, %v67
    %v1190 = vmul.f32 %v1173, %v67
    %v1191 = vrot.slane %v1189, 4
    %v1192 = vadd.f32 %v1189, %v1191
    %v1193 = vrot.slane %v1192, 2
    %v1194 = vadd.f32 %v1192, %v1193
    %v1195 = vrot.slane %v1194, 1
    %v1196 = vadd.f32 %v1194, %v1195
    %v1197 = vrot.slane %v1190, 4
    %v1198 = vadd.f32 %v1190, %v1197
    %v1199 = vrot.slane %v1198, 2
    %v1200 = vadd.f32 %v1198, %v1199
    %v1201 = vrot.slane %v1200, 1
    %v1202 = vadd.f32 %v1200, %v1201
    %v1203 = vmul.f32 %v1196, 0.25
    %v1204 = vmul.f32 %v1202, 0.25
    %v1205 = vmul.f32 %v67, %v1203
    %v1206 = vmul.f32 %v67, %v1204
    %v1207 = vsub.f32 %v1182, %v1196
    %v1208 = vsub.f32 %v1188, %v1202
    %v1209 = vmul.f32 %v1207, 0.25
    %v1210 = vmul.f32 %v1208, 0.25
    %v1211 = vmul.f32 %v68, %v1209
    %v1212 = vmul.f32 %v68, %v1210
    %v1213 = vadd.f32 %v1205, %v1211
    %v1214 = vadd.f32 %v1206, %v1212
    %v1215 = vsub.f32 %v1171, %v1213
    %v1216 = vsub.f32 %v1173, %v1214
    %v1217 = vmul.f32 %v1215, %v1215
    %v1218 = vmul.f32 %v1216, %v1216
    %v1219 = vrot.slane %v1217, 4
    %v1220 = vadd.f32 %v1217, %v1219
    %v1221 = vrot.slane %v1220, 2
    %v1222 = vadd.f32 %v1220, %v1221
    %v1223 = vrot.slane %v1222, 1
    %v1224 = vadd.f32 %v1222, %v1223
    %v1225 = vrot.slane %v1218, 4
    %v1226 = vadd.f32 %v1218, %v1225
    %v1227 = vrot.slane %v1226, 2
    %v1228 = vadd.f32 %v1226, %v1227
    %v1229 = vrot.slane %v1228, 1
    %v1230 = vadd.f32 %v1228, %v1229
    %v1231 = vmul.f32 %v1217, %v67
    %v1232 = vmul.f32 %v1218, %v67
    %v1233 = vrot.slane %v1231, 4
    %v1234 = vadd.f32 %v1231, %v1233
    %v1235 = vrot.slane %v1234, 2
    %v1236 = vadd.f32 %v1234, %v1235
    %v1237 = vrot.slane %v1236, 1
    %v1238 = vadd.f32 %v1236, %v1237
    %v1239 = vrot.slane %v1232, 4
    %v1240 = vadd.f32 %v1232, %v1239
    %v1241 = vrot.slane %v1240, 2
    %v1242 = vadd.f32 %v1240, %v1241
    %v1243 = vrot.slane %v1242, 1
    %v1244 = vadd.f32 %v1242, %v1243
    %v1245 = vmul.f32 %v1238, 0.25
    %v1246 = vmul.f32 %v1244, 0.25
    %v1247 = vmul.f32 %v67, %v1245
    %v1248 = vmul.f32 %v67, %v1246
    %v1249 = vsub.f32 %v1224, %v1238
    %v1250 = vsub.f32 %v1230, %v1244
    %v1251 = vmul.f32 %v1249, 0.25
    %v1252 = vmul.f32 %v1250, 0.25
    %v1253 = vmul.f32 %v68, %v1251
    %v1254 = vmul.f32 %v68, %v1252
    %v1255 = vadd.f32 %v1247, %v1253
    %v1256 = vadd.f32 %v1248, %v1254
    %v1257 = vlaneseq
    %v1258 = vshrl.u32 %v1257, 7
    %v1259 = vsub.s32 6, %v1258
    %v1260 = vrot.slane %v59, %v1259
    %v1261 = vlaneseq
    %v1262 = vshrl.u32 %v1261, 7
    %v1263 = vsub.s32 6, %v1262
    %v1264 = vrot.slane %v60, %v1263
    %v1265 = vmul.f32 %v1260, %v1215
    %v1266 = vmul.f32 %v1264, %v1216
    %v1267 = vadd.f32 %v1255, 1e-05
    %v1268 = vadd.f32 %v1256, 1e-05
    %v1269 = vrsqrt.pop %v1267
    %v1270 = vrsqrt.pop %v1268
    %v1271 = vmul.f32 %v1265, %v1269
    %v1272 = vmul.f32 %v1266, %v1270
    %v1273 = vlaneseq
    %v1274 = vshrl.u32 %v1273, 7
    %v1275 = vsub.s32 7, %v1274
    %v1276 = vrot.slane %v59, %v1275
    %v1277 = vlaneseq
    %v1278 = vshrl.u32 %v1277, 7
    %v1279 = vsub.s32 7, %v1278
    %v1280 = vrot.slane %v60, %v1279
    %v1281 = vadd.f32 %v1271, %v1276
    %v1282 = vadd.f32 %v1272, %v1280
    %v1283 = vmax.f32 %v1281, 0.0
    %v1284 = vmax.f32 %v1282, 0.0
    %s1285 = sshll.u32 %s853, 4
    %1286 = dma.done %s33, %s1285
    %v1287 = vpack.c.bf16 %v1283, %v1283
    %v1288 = vpack.c.bf16 %v1284, %v1284
    %v1289 = vld [vmem:[%s32] sm:$0xf]
    %v1290 = vld [vmem:[%s32 + $0x4] sm:$0xf]
    %v1291 = vld [vmem:[%s32 + $0x8] sm:$0xf]
    %v1292 = vld [vmem:[%s32 + $0xc] sm:$0xf]
    %v1293 = vld [vmem:[%s32 + $0x10] sm:$0xf]
    %v1294 = vld [vmem:[%s32 + $0x14] sm:$0xf]
    %v1295 = vld [vmem:[%s32 + $0x18] sm:$0xf]
    %v1296 = vld [vmem:[%s32 + $0x1c] sm:$0xf]
    %v1297 = vld [vmem:[%s32 + $0x20] sm:$0xf]
    %v1298 = vld [vmem:[%s32 + $0x24] sm:$0xf]
    %v1299 = vld [vmem:[%s32 + $0x28] sm:$0xf]
    %v1300 = vld [vmem:[%s32 + $0x2c] sm:$0xf]
    %v1301 = vld [vmem:[%s32 + $0x30] sm:$0xf]
    %v1302 = vld [vmem:[%s32 + $0x34] sm:$0xf]
    %v1303 = vld [vmem:[%s32 + $0x38] sm:$0xf]
    %v1304 = vld [vmem:[%s32 + $0x3c] sm:$0xf]
    %v1305 = vld [vmem:[%s32 + $0x40] sm:$0xf]
    %v1306 = vld [vmem:[%s32 + $0x44] sm:$0xf]
    %v1307 = vld [vmem:[%s32 + $0x48] sm:$0xf]
    %v1308 = vld [vmem:[%s32 + $0x4c] sm:$0xf]
    %v1309 = vld [vmem:[%s32 + $0x50] sm:$0xf]
    %v1310 = vld [vmem:[%s32 + $0x54] sm:$0xf]
    %v1311 = vld [vmem:[%s32 + $0x58] sm:$0xf]
    %v1312 = vld [vmem:[%s32 + $0x5c] sm:$0xf]
    %v1313 = vld [vmem:[%s32 + $0x60] sm:$0xf]
    %v1314 = vld [vmem:[%s32 + $0x64] sm:$0xf]
    %v1315 = vld [vmem:[%s32 + $0x68] sm:$0xf]
    %v1316 = vld [vmem:[%s32 + $0x6c] sm:$0xf]
    %v1317 = vld [vmem:[%s32 + $0x70] sm:$0xf]
    %v1318 = vld [vmem:[%s32 + $0x74] sm:$0xf]
    %v1319 = vld [vmem:[%s32 + $0x78] sm:$0xf]
    %v1320 = vld [vmem:[%s32 + $0x7c] sm:$0xf]
    %v1321 = vlaneseq
    %v1322 = vshrl.u32 %v1321, 7
    %v1323 = vsub.s32 0, %v1322
    %v1324 = vrot.slane %v61, %v1323
    %v1357 = vunpack.c.l.b16 %v1289
    %v1358 = vunpack.c.l.b16 %v1290
    %v1359 = vunpack.c.l.b16 %v1291
    %v1360 = vunpack.c.l.b16 %v1292
    %v1361 = vunpack.c.l.b16 %v1293
    %v1362 = vunpack.c.l.b16 %v1294
    %v1363 = vunpack.c.l.b16 %v1295
    %v1364 = vunpack.c.l.b16 %v1296
    %v1365 = vunpack.c.l.b16 %v1297
    %v1366 = vunpack.c.l.b16 %v1298
    %v1367 = vunpack.c.l.b16 %v1299
    %v1368 = vunpack.c.l.b16 %v1300
    %v1369 = vunpack.c.l.b16 %v1301
    %v1370 = vunpack.c.l.b16 %v1302
    %v1371 = vunpack.c.l.b16 %v1303
    %v1372 = vunpack.c.l.b16 %v1304
    %v1373 = vunpack.c.l.b16 %v1305
    %v1374 = vunpack.c.l.b16 %v1306
    %v1375 = vunpack.c.l.b16 %v1307
    %v1376 = vunpack.c.l.b16 %v1308
    %v1377 = vunpack.c.l.b16 %v1309
    %v1378 = vunpack.c.l.b16 %v1310
    %v1379 = vunpack.c.l.b16 %v1311
    %v1380 = vunpack.c.l.b16 %v1312
    %v1381 = vunpack.c.l.b16 %v1313
    %v1382 = vunpack.c.l.b16 %v1314
    %v1383 = vunpack.c.l.b16 %v1315
    %v1384 = vunpack.c.l.b16 %v1316
    %v1385 = vunpack.c.l.b16 %v1317
    %v1386 = vunpack.c.l.b16 %v1318
    %v1387 = vunpack.c.l.b16 %v1319
    %v1388 = vunpack.c.l.b16 %v1320
    %v1389 = vpack.c.b16 %v1358, %v1357
    %v1390 = vpack.c.b16 %v1360, %v1359
    %v1391 = vpack.c.b16 %v1362, %v1361
    %v1392 = vpack.c.b16 %v1364, %v1363
    %v1393 = vpack.c.b16 %v1366, %v1365
    %v1394 = vpack.c.b16 %v1368, %v1367
    %v1395 = vpack.c.b16 %v1370, %v1369
    %v1396 = vpack.c.b16 %v1372, %v1371
    %v1397 = vpack.c.b16 %v1374, %v1373
    %v1398 = vpack.c.b16 %v1376, %v1375
    %v1399 = vpack.c.b16 %v1378, %v1377
    %v1400 = vpack.c.b16 %v1380, %v1379
    %v1401 = vpack.c.b16 %v1382, %v1381
    %v1402 = vpack.c.b16 %v1384, %v1383
    %v1403 = vpack.c.b16 %v1386, %v1385
    %v1404 = vpack.c.b16 %v1388, %v1387
    %1421 = vmatprep.subr.bf16.mxu0 0
    %1422 = vmatpush1.bf16.msra.mxu0 %v1396
    %1423 = vmatprep.subr.bf16.mxu0 0
    %1424 = vmatpush1.bf16.msra.mxu0 %v1395
    %1425 = vmatprep.subr.bf16.mxu0 0
    %1426 = vmatpush1.bf16.msra.mxu0 %v1394
    %1427 = vmatprep.subr.bf16.mxu0 0
    %1428 = vmatpush1.bf16.msra.mxu0 %v1393
    %1429 = vmatprep.subr.bf16.mxu0 0
    %1430 = vmatpush1.bf16.msra.mxu0 %v1392
    %1431 = vmatprep.subr.bf16.mxu0 0
    %1432 = vmatpush1.bf16.msra.mxu0 %v1391
    %1433 = vmatprep.subr.bf16.mxu0 0
    %1434 = vmatpush1.bf16.msra.mxu0 %v1390
    %1435 = vmatprep.subr.bf16.mxu0 0
    %1436 = vmatpush1.bf16.msra.mxu0 %v1389
    %1437 = vmatprep.subr.bf16.mxu0 0
    %1438 = vmatpush2.bf16.msra.mxu0 %v1404
    %1439 = vmatprep.subr.bf16.mxu0 0
    %1440 = vmatpush2.bf16.msra.mxu0 %v1403
    %1441 = vmatprep.subr.bf16.mxu0 0
    %1442 = vmatpush2.bf16.msra.mxu0 %v1402
    %1443 = vmatprep.subr.bf16.mxu0 0
    %1444 = vmatpush2.bf16.msra.mxu0 %v1401
    %1445 = vmatprep.subr.bf16.mxu0 0
    %1446 = vmatpush2.bf16.msra.mxu0 %v1400
    %1447 = vmatprep.subr.bf16.mxu0 0
    %1448 = vmatpush2.bf16.msra.mxu0 %v1399
    %1449 = vmatprep.subr.bf16.mxu0 0
    %1450 = vmatpush2.bf16.msra.mxu0 %v1398
    %1451 = vmatprep.subr.bf16.mxu0 0
    %1452 = vmatpush2.bf16.msra.mxu0 %v1397
    %1453 = vmatprep.mubr.bf16.mxu0 %v1288
    %1454 = vmatmul.mubr.bf16.gmra.mxu0 %v1287
    %v1455 = vpop.f32.mrf.mxu0
    %v1456 = vadd.f32 %v1324, %v1455
    %v1457 = vpop.f32.mrf.mxu0
    %v1458 = vpop.f32.mrf.mxu0
    %v1459 = vpop.f32.mrf.mxu0
    %1460 = vdwg.mxu0
    %v1461 = vpack.c.bf16 %v597, %v597
    %s1462 = scalar_lea.vmem %s2, 256
    %v1463 = vld [vmem:[%s1462] sm:$0xff]
    %v1464 = vld [vmem:[%s1462 + $0x8] sm:$0xff]
    %v1465 = vld [vmem:[%s1462 + $0x10] sm:$0xff]
    %v1466 = vld [vmem:[%s1462 + $0x18] sm:$0xff]
    %v1467 = vld [vmem:[%s1462 + $0x20] sm:$0xff]
    %v1468 = vld [vmem:[%s1462 + $0x28] sm:$0xff]
    %v1469 = vld [vmem:[%s1462 + $0x30] sm:$0xff]
    %v1470 = vld [vmem:[%s1462 + $0x38] sm:$0xff]
    %v1471 = vld [vmem:[%s1462 + $0x40] sm:$0xff]
    %v1472 = vld [vmem:[%s1462 + $0x48] sm:$0xff]
    %v1473 = vld [vmem:[%s1462 + $0x50] sm:$0xff]
    %v1474 = vld [vmem:[%s1462 + $0x58] sm:$0xff]
    %v1475 = vld [vmem:[%s1462 + $0x60] sm:$0xff]
    %v1476 = vld [vmem:[%s1462 + $0x68] sm:$0xff]
    %v1477 = vld [vmem:[%s1462 + $0x70] sm:$0xff]
    %v1478 = vld [vmem:[%s1462 + $0x78] sm:$0xff]
    %v1479 = vlaneseq
    %v1480 = vshrl.u32 %v1479, 7
    %v1481 = vsub.s32 1, %v1480
    %v1482 = vrot.slane %v61, %v1481
    %v1483 = vlaneseq
    %v1484 = vshrl.u32 %v1483, 7
    %v1485 = vsub.s32 1, %v1484
    %v1486 = vrot.slane %v62, %v1485
    %v1503 = vunpack.c.l.b16 %v1463
    %v1504 = vunpack.c.h.b16 %v1463
    %v1505 = vunpack.c.l.b16 %v1464
    %v1506 = vunpack.c.h.b16 %v1464
    %v1507 = vunpack.c.l.b16 %v1465
    %v1508 = vunpack.c.h.b16 %v1465
    %v1509 = vunpack.c.l.b16 %v1466
    %v1510 = vunpack.c.h.b16 %v1466
    %v1511 = vunpack.c.l.b16 %v1467
    %v1512 = vunpack.c.h.b16 %v1467
    %v1513 = vunpack.c.l.b16 %v1468
    %v1514 = vunpack.c.h.b16 %v1468
    %v1515 = vunpack.c.l.b16 %v1469
    %v1516 = vunpack.c.h.b16 %v1469
    %v1517 = vunpack.c.l.b16 %v1470
    %v1518 = vunpack.c.h.b16 %v1470
    %v1519 = vunpack.c.l.b16 %v1471
    %v1520 = vunpack.c.h.b16 %v1471
    %v1521 = vunpack.c.l.b16 %v1472
    %v1522 = vunpack.c.h.b16 %v1472
    %v1523 = vunpack.c.l.b16 %v1473
    %v1524 = vunpack.c.h.b16 %v1473
    %v1525 = vunpack.c.l.b16 %v1474
    %v1526 = vunpack.c.h.b16 %v1474
    %v1527 = vunpack.c.l.b16 %v1475
    %v1528 = vunpack.c.h.b16 %v1475
    %v1529 = vunpack.c.l.b16 %v1476
    %v1530 = vunpack.c.h.b16 %v1476
    %v1531 = vunpack.c.l.b16 %v1477
    %v1532 = vunpack.c.h.b16 %v1477
    %v1533 = vunpack.c.l.b16 %v1478
    %v1534 = vunpack.c.h.b16 %v1478
    %v1535 = vpack.c.b16 %v1505, %v1503
    %v1536 = vpack.c.b16 %v1506, %v1504
    %v1537 = vpack.c.b16 %v1509, %v1507
    %v1538 = vpack.c.b16 %v1510, %v1508
    %v1539 = vpack.c.b16 %v1513, %v1511
    %v1540 = vpack.c.b16 %v1514, %v1512
    %v1541 = vpack.c.b16 %v1517, %v1515
    %v1542 = vpack.c.b16 %v1518, %v1516
    %v1543 = vpack.c.b16 %v1521, %v1519
    %v1544 = vpack.c.b16 %v1522, %v1520
    %v1545 = vpack.c.b16 %v1525, %v1523
    %v1546 = vpack.c.b16 %v1526, %v1524
    %v1547 = vpack.c.b16 %v1529, %v1527
    %v1548 = vpack.c.b16 %v1530, %v1528
    %v1549 = vpack.c.b16 %v1533, %v1531
    %v1550 = vpack.c.b16 %v1534, %v1532
    %1567 = vmatprep.subr.bf16.mxu0 %v1550
    %1568 = vmatpush1.bf16.msra.mxu0 %v1549
    %1569 = vmatprep.subr.bf16.mxu0 %v1548
    %1570 = vmatpush1.bf16.msra.mxu0 %v1547
    %1571 = vmatprep.subr.bf16.mxu0 %v1546
    %1572 = vmatpush1.bf16.msra.mxu0 %v1545
    %1573 = vmatprep.subr.bf16.mxu0 %v1544
    %1574 = vmatpush1.bf16.msra.mxu0 %v1543
    %1575 = vmatprep.subr.bf16.mxu0 %v1542
    %1576 = vmatpush1.bf16.msra.mxu0 %v1541
    %1577 = vmatprep.subr.bf16.mxu0 %v1540
    %1578 = vmatpush1.bf16.msra.mxu0 %v1539
    %1579 = vmatprep.subr.bf16.mxu0 %v1538
    %1580 = vmatpush1.bf16.msra.mxu0 %v1537
    %1581 = vmatprep.subr.bf16.mxu0 %v1536
    %1582 = vmatpush1.bf16.msra.mxu0 %v1535
    %1583 = vmatprep.subr.bf16.mxu0 0
    %1584 = vmatpush2.bf16.msra.mxu0 0
    %1585 = vmatprep.subr.bf16.mxu0 0
    %1586 = vmatpush2.bf16.msra.mxu0 0
    %1587 = vmatprep.subr.bf16.mxu0 0
    %1588 = vmatpush2.bf16.msra.mxu0 0
    %1589 = vmatprep.subr.bf16.mxu0 0
    %1590 = vmatpush2.bf16.msra.mxu0 0
    %1591 = vmatprep.subr.bf16.mxu0 0
    %1592 = vmatpush2.bf16.msra.mxu0 0
    %1593 = vmatprep.subr.bf16.mxu0 0
    %1594 = vmatpush2.bf16.msra.mxu0 0
    %1595 = vmatprep.subr.bf16.mxu0 0
    %1596 = vmatpush2.bf16.msra.mxu0 0
    %1597 = vmatprep.subr.bf16.mxu0 0
    %1598 = vmatpush2.bf16.msra.mxu0 0
    %1599 = vmatprep.mubr.bf16.mxu0 0
    %1600 = vmatmul.mubr.bf16.gmra.mxu0 %v1461
    %v1601 = vpop.f32.mrf.mxu0
    %v1602 = vadd.f32 %v1482, %v1601
    %v1603 = vpop.f32.mrf.mxu0
    %v1604 = vadd.f32 %v1486, %v1603
    %v1605 = vpop.f32.mrf.mxu0
    %v1606 = vpop.f32.mrf.mxu0
    %1607 = vdwg.mxu0
    %v1608 = vrot.slane %v1602, 4
    %v1609 = vadd.f32 %v1602, %v1608
    %v1610 = vrot.slane %v1609, 2
    %v1611 = vadd.f32 %v1609, %v1610
    %v1612 = vrot.slane %v1611, 1
    %v1613 = vadd.f32 %v1611, %v1612
    %v1614 = vrot.slane %v1604, 4
    %v1615 = vadd.f32 %v1604, %v1614
    %v1616 = vrot.slane %v1615, 2
    %v1617 = vadd.f32 %v1615, %v1616
    %v1618 = vrot.slane %v1617, 1
    %v1619 = vadd.f32 %v1617, %v1618
    %v1620 = vmul.f32 %v1602, %v67
    %v1621 = vmul.f32 %v1604, %v67
    %v1622 = vrot.slane %v1620, 4
    %v1623 = vadd.f32 %v1620, %v1622
    %v1624 = vrot.slane %v1623, 2
    %v1625 = vadd.f32 %v1623, %v1624
    %v1626 = vrot.slane %v1625, 1
    %v1627 = vadd.f32 %v1625, %v1626
    %v1628 = vrot.slane %v1621, 4
    %v1629 = vadd.f32 %v1621, %v1628
    %v1630 = vrot.slane %v1629, 2
    %v1631 = vadd.f32 %v1629, %v1630
    %v1632 = vrot.slane %v1631, 1
    %v1633 = vadd.f32 %v1631, %v1632
    %v1634 = vmul.f32 %v1627, 0.25
    %v1635 = vmul.f32 %v1633, 0.25
    %v1636 = vmul.f32 %v67, %v1634
    %v1637 = vmul.f32 %v67, %v1635
    %v1638 = vsub.f32 %v1613, %v1627
    %v1639 = vsub.f32 %v1619, %v1633
    %v1640 = vmul.f32 %v1638, 0.25
    %v1641 = vmul.f32 %v1639, 0.25
    %v1642 = vmul.f32 %v68, %v1640
    %v1643 = vmul.f32 %v68, %v1641
    %v1644 = vadd.f32 %v1636, %v1642
    %v1645 = vadd.f32 %v1637, %v1643
    %v1646 = vsub.f32 %v1602, %v1644
    %v1647 = vsub.f32 %v1604, %v1645
    %v1648 = vmul.f32 %v1646, %v1646
    %v1649 = vmul.f32 %v1647, %v1647
    %v1650 = vrot.slane %v1648, 4
    %v1651 = vadd.f32 %v1648, %v1650
    %v1652 = vrot.slane %v1651, 2
    %v1653 = vadd.f32 %v1651, %v1652
    %v1654 = vrot.slane %v1653, 1
    %v1655 = vadd.f32 %v1653, %v1654
    %v1656 = vrot.slane %v1649, 4
    %v1657 = vadd.f32 %v1649, %v1656
    %v1658 = vrot.slane %v1657, 2
    %v1659 = vadd.f32 %v1657, %v1658
    %v1660 = vrot.slane %v1659, 1
    %v1661 = vadd.f32 %v1659, %v1660
    %v1662 = vmul.f32 %v1648, %v67
    %v1663 = vmul.f32 %v1649, %v67
    %v1664 = vrot.slane %v1662, 4
    %v1665 = vadd.f32 %v1662, %v1664
    %v1666 = vrot.slane %v1665, 2
    %v1667 = vadd.f32 %v1665, %v1666
    %v1668 = vrot.slane %v1667, 1
    %v1669 = vadd.f32 %v1667, %v1668
    %v1670 = vrot.slane %v1663, 4
    %v1671 = vadd.f32 %v1663, %v1670
    %v1672 = vrot.slane %v1671, 2
    %v1673 = vadd.f32 %v1671, %v1672
    %v1674 = vrot.slane %v1673, 1
    %v1675 = vadd.f32 %v1673, %v1674
    %v1676 = vmul.f32 %v1669, 0.25
    %v1677 = vmul.f32 %v1675, 0.25
    %v1678 = vmul.f32 %v67, %v1676
    %v1679 = vmul.f32 %v67, %v1677
    %v1680 = vsub.f32 %v1655, %v1669
    %v1681 = vsub.f32 %v1661, %v1675
    %v1682 = vmul.f32 %v1680, 0.25
    %v1683 = vmul.f32 %v1681, 0.25
    %v1684 = vmul.f32 %v68, %v1682
    %v1685 = vmul.f32 %v68, %v1683
    %v1686 = vadd.f32 %v1678, %v1684
    %v1687 = vadd.f32 %v1679, %v1685
    %v1688 = vlaneseq
    %v1689 = vshrl.u32 %v1688, 7
    %v1690 = vsub.s32 2, %v1689
    %v1691 = vrot.slane %v61, %v1690
    %v1692 = vlaneseq
    %v1693 = vshrl.u32 %v1692, 7
    %v1694 = vsub.s32 2, %v1693
    %v1695 = vrot.slane %v62, %v1694
    %v1696 = vmul.f32 %v1691, %v1646
    %v1697 = vmul.f32 %v1695, %v1647
    %v1698 = vadd.f32 %v1686, 1e-05
    %v1699 = vadd.f32 %v1687, 1e-05
    %v1700 = vrsqrt.pop %v1698
    %v1701 = vrsqrt.pop %v1699
    %v1702 = vmul.f32 %v1696, %v1700
    %v1703 = vmul.f32 %v1697, %v1701
    %v1704 = vlaneseq
    %v1705 = vshrl.u32 %v1704, 7
    %v1706 = vsub.s32 3, %v1705
    %v1707 = vrot.slane %v61, %v1706
    %v1708 = vlaneseq
    %v1709 = vshrl.u32 %v1708, 7
    %v1710 = vsub.s32 3, %v1709
    %v1711 = vrot.slane %v62, %v1710
    %v1712 = vadd.f32 %v1702, %v1707
    %v1713 = vadd.f32 %v1703, %v1711
    %v1714 = vmax.f32 %v1712, 0.0
    %v1715 = vmax.f32 %v1713, 0.0
    %s1716 = sshll.u32 %s853, 4
    %1717 = dma.done %s47, %s1716
    %v1718 = vpack.c.bf16 %v1714, %v1714
    %v1719 = vpack.c.bf16 %v1715, %v1715
    %v1720 = vld [vmem:[%s46] sm:$0xf]
    %v1721 = vld [vmem:[%s46 + $0x4] sm:$0xf]
    %v1722 = vld [vmem:[%s46 + $0x8] sm:$0xf]
    %v1723 = vld [vmem:[%s46 + $0xc] sm:$0xf]
    %v1724 = vld [vmem:[%s46 + $0x10] sm:$0xf]
    %v1725 = vld [vmem:[%s46 + $0x14] sm:$0xf]
    %v1726 = vld [vmem:[%s46 + $0x18] sm:$0xf]
    %v1727 = vld [vmem:[%s46 + $0x1c] sm:$0xf]
    %v1728 = vld [vmem:[%s46 + $0x20] sm:$0xf]
    %v1729 = vld [vmem:[%s46 + $0x24] sm:$0xf]
    %v1730 = vld [vmem:[%s46 + $0x28] sm:$0xf]
    %v1731 = vld [vmem:[%s46 + $0x2c] sm:$0xf]
    %v1732 = vld [vmem:[%s46 + $0x30] sm:$0xf]
    %v1733 = vld [vmem:[%s46 + $0x34] sm:$0xf]
    %v1734 = vld [vmem:[%s46 + $0x38] sm:$0xf]
    %v1735 = vld [vmem:[%s46 + $0x3c] sm:$0xf]
    %v1736 = vld [vmem:[%s46 + $0x40] sm:$0xf]
    %v1737 = vld [vmem:[%s46 + $0x44] sm:$0xf]
    %v1738 = vld [vmem:[%s46 + $0x48] sm:$0xf]
    %v1739 = vld [vmem:[%s46 + $0x4c] sm:$0xf]
    %v1740 = vld [vmem:[%s46 + $0x50] sm:$0xf]
    %v1741 = vld [vmem:[%s46 + $0x54] sm:$0xf]
    %v1742 = vld [vmem:[%s46 + $0x58] sm:$0xf]
    %v1743 = vld [vmem:[%s46 + $0x5c] sm:$0xf]
    %v1744 = vld [vmem:[%s46 + $0x60] sm:$0xf]
    %v1745 = vld [vmem:[%s46 + $0x64] sm:$0xf]
    %v1746 = vld [vmem:[%s46 + $0x68] sm:$0xf]
    %v1747 = vld [vmem:[%s46 + $0x6c] sm:$0xf]
    %v1748 = vld [vmem:[%s46 + $0x70] sm:$0xf]
    %v1749 = vld [vmem:[%s46 + $0x74] sm:$0xf]
    %v1750 = vld [vmem:[%s46 + $0x78] sm:$0xf]
    %v1751 = vld [vmem:[%s46 + $0x7c] sm:$0xf]
    %v1752 = vlaneseq
    %v1753 = vshrl.u32 %v1752, 7
    %v1754 = vsub.s32 4, %v1753
    %v1755 = vrot.slane %v61, %v1754
    %v1788 = vunpack.c.l.b16 %v1720
    %v1789 = vunpack.c.l.b16 %v1721
    %v1790 = vunpack.c.l.b16 %v1722
    %v1791 = vunpack.c.l.b16 %v1723
    %v1792 = vunpack.c.l.b16 %v1724
    %v1793 = vunpack.c.l.b16 %v1725
    %v1794 = vunpack.c.l.b16 %v1726
    %v1795 = vunpack.c.l.b16 %v1727
    %v1796 = vunpack.c.l.b16 %v1728
    %v1797 = vunpack.c.l.b16 %v1729
    %v1798 = vunpack.c.l.b16 %v1730
    %v1799 = vunpack.c.l.b16 %v1731
    %v1800 = vunpack.c.l.b16 %v1732
    %v1801 = vunpack.c.l.b16 %v1733
    %v1802 = vunpack.c.l.b16 %v1734
    %v1803 = vunpack.c.l.b16 %v1735
    %v1804 = vunpack.c.l.b16 %v1736
    %v1805 = vunpack.c.l.b16 %v1737
    %v1806 = vunpack.c.l.b16 %v1738
    %v1807 = vunpack.c.l.b16 %v1739
    %v1808 = vunpack.c.l.b16 %v1740
    %v1809 = vunpack.c.l.b16 %v1741
    %v1810 = vunpack.c.l.b16 %v1742
    %v1811 = vunpack.c.l.b16 %v1743
    %v1812 = vunpack.c.l.b16 %v1744
    %v1813 = vunpack.c.l.b16 %v1745
    %v1814 = vunpack.c.l.b16 %v1746
    %v1815 = vunpack.c.l.b16 %v1747
    %v1816 = vunpack.c.l.b16 %v1748
    %v1817 = vunpack.c.l.b16 %v1749
    %v1818 = vunpack.c.l.b16 %v1750
    %v1819 = vunpack.c.l.b16 %v1751
    %v1820 = vpack.c.b16 %v1789, %v1788
    %v1821 = vpack.c.b16 %v1791, %v1790
    %v1822 = vpack.c.b16 %v1793, %v1792
    %v1823 = vpack.c.b16 %v1795, %v1794
    %v1824 = vpack.c.b16 %v1797, %v1796
    %v1825 = vpack.c.b16 %v1799, %v1798
    %v1826 = vpack.c.b16 %v1801, %v1800
    %v1827 = vpack.c.b16 %v1803, %v1802
    %v1828 = vpack.c.b16 %v1805, %v1804
    %v1829 = vpack.c.b16 %v1807, %v1806
    %v1830 = vpack.c.b16 %v1809, %v1808
    %v1831 = vpack.c.b16 %v1811, %v1810
    %v1832 = vpack.c.b16 %v1813, %v1812
    %v1833 = vpack.c.b16 %v1815, %v1814
    %v1834 = vpack.c.b16 %v1817, %v1816
    %v1835 = vpack.c.b16 %v1819, %v1818
    %1852 = vmatprep.subr.bf16.mxu0 0
    %1853 = vmatpush1.bf16.msra.mxu0 %v1827
    %1854 = vmatprep.subr.bf16.mxu0 0
    %1855 = vmatpush1.bf16.msra.mxu0 %v1826
    %1856 = vmatprep.subr.bf16.mxu0 0
    %1857 = vmatpush1.bf16.msra.mxu0 %v1825
    %1858 = vmatprep.subr.bf16.mxu0 0
    %1859 = vmatpush1.bf16.msra.mxu0 %v1824
    %1860 = vmatprep.subr.bf16.mxu0 0
    %1861 = vmatpush1.bf16.msra.mxu0 %v1823
    %1862 = vmatprep.subr.bf16.mxu0 0
    %1863 = vmatpush1.bf16.msra.mxu0 %v1822
    %1864 = vmatprep.subr.bf16.mxu0 0
    %1865 = vmatpush1.bf16.msra.mxu0 %v1821
    %1866 = vmatprep.subr.bf16.mxu0 0
    %1867 = vmatpush1.bf16.msra.mxu0 %v1820
    %1868 = vmatprep.subr.bf16.mxu0 0
    %1869 = vmatpush2.bf16.msra.mxu0 %v1835
    %1870 = vmatprep.subr.bf16.mxu0 0
    %1871 = vmatpush2.bf16.msra.mxu0 %v1834
    %1872 = vmatprep.subr.bf16.mxu0 0
    %1873 = vmatpush2.bf16.msra.mxu0 %v1833
    %1874 = vmatprep.subr.bf16.mxu0 0
    %1875 = vmatpush2.bf16.msra.mxu0 %v1832
    %1876 = vmatprep.subr.bf16.mxu0 0
    %1877 = vmatpush2.bf16.msra.mxu0 %v1831
    %1878 = vmatprep.subr.bf16.mxu0 0
    %1879 = vmatpush2.bf16.msra.mxu0 %v1830
    %1880 = vmatprep.subr.bf16.mxu0 0
    %1881 = vmatpush2.bf16.msra.mxu0 %v1829
    %1882 = vmatprep.subr.bf16.mxu0 0
    %1883 = vmatpush2.bf16.msra.mxu0 %v1828
    %1884 = vmatprep.mubr.bf16.mxu0 %v1719
    %1885 = vmatmul.mubr.bf16.gmra.mxu0 %v1718
    %v1886 = vpop.f32.mrf.mxu0
    %v1887 = vadd.f32 %v1755, %v1886
    %v1888 = vpop.f32.mrf.mxu0
    %v1889 = vpop.f32.mrf.mxu0
    %v1890 = vpop.f32.mrf.mxu0
    %1891 = vdwg.mxu0
    %v1892 = vmul.f32 %v1456, %v1456
    %1893 = vadd.xlane.f32.xlu0 %v1892
    %v1894 = vpop.xlane.xlu0 %1893
    %v1895 = vmax.f32 %v1894, 1e-24
    %v1896 = vrsqrt.pop %v1895
    %v1897 = vmul.f32 %v1456, %v1896
    %v1898 = vmul.f32 %v1887, %v1887
    %1899 = vadd.xlane.f32.xlu0 %v1898
    %v1900 = vpop.xlane.xlu0 %1899
    %v1901 = vmax.f32 %v1900, 1e-24
    %v1902 = vrsqrt.pop %v1901
    %v1903 = vmul.f32 %v1887, %v1902
    %v1904 = vrot.slane %v1903, 4
    %v1905 = vmul.f32 %v1897, %v1904
    %1906 = vadd.xlane.f32.xlu0 %v1905
    %v1907 = vpop.xlane.xlu0 %1906
    %v1908 = vrot.slane %v1907, 4
    %v1909 = vadd.f32 %v1907, %v1908
    %v1910 = vrot.slane %v1909, 2
    %v1911 = vadd.f32 %v1909, %v1910
    %v1912 = vrot.slane %v1911, 1
    %v1913 = vadd.f32 %v1911, %v1912
    %s1914 = vtos %v1913
    %s1915 = ssub.f32 0.0, %s1914
    %s1916 = smul.f32 %s1915, 0.125
    %s1917 = scalar_lea.smem [#allocation4], 0
    %1918 = sst [smem:[%s1917]] %s1916
    // Predicated region
    $region30: #{point_byol_forward.1} parent=1 // pred_check
      _
    $region31: #{point_byol_forward.1} parent=1 // pred_check_branch
      %1920 = sbr.rel (0) target = $region33
    $region32: #{point_byol_forward.1} parent=1 // pred_region
      %s1922 = ssub.s32 16, 16
      %1923 = vsyncadd [#allocation5], %s1922
      %1926 = dma.smem_to_hbm [#allocation4], 16, %s5, [#allocation5]
    $region33: #{point_byol_forward.1} parent=1 // pred_fallthru
      _
    // Predicated region
    $region34: #{point_byol_forward.1} parent=1 // pred_check
      _
    $region35: #{point_byol_forward.1} parent=1 // pred_check_branch
      %1928 = sbr.rel (0) target = $region37
    $region36: #{point_byol_forward.1} parent=1 // pred_region
      %1929 = dma.done [#allocation5], 16
    $region37: #{point_byol_forward.1} parent=1 // pred_fallthru
      _
    %1930 = sfence
    %1931 = vsyncpa [#allocation5], 1
  %1932 = vsyncmov [#allocation3]
  %s1933 = vpop.sfrf %1932
  %p1934 = scmp.eq.s32.totalorder %s1933, 0
  %p1935 = pneg %p1934
  %1937 = shalt.err (%p1935)
  %s1938 = scalar_lea.sflag [#allocation3], 1
  %1939 = vsyncmov %s1938
  %s1940 = vpop.sfrf %1939
  %p1941 = scmp.eq.s32.totalorder %s1940, 0
  %p1942 = pneg %p1941
  %1944 = shalt.err (%p1942)
  %s1945 = scalar_lea.sflag [#allocation3], 2
  %1946 = vsyncmov %s1945
  %s1947 = vpop.sfrf %1946
  %p1948 = scmp.eq.s32.totalorder %s1947, 0
  %p1949 = pneg %p1948
  %1951 = shalt.err (%p1949)

</llo_original>
